<compile_context>
chip_gen: v5e
topology: v5e:2x2
jax: 0.10.0
libtpu: 0.0.40
codegen_flags: <defaults>
</compile_context>

<pallas_src>
import math

import jax
import jax.numpy as jnp
from jax.experimental import pallas as pl
from jax.experimental.pallas import tpu as pltpu

# ----------------------------- hyper-parameters ------------------------------
NTOKEN = 50              # vocab size
NINP = 32                # d_model
NHEAD = 2
NHID = 64                # feed-forward hidden size
NLAYERS = 2
SEQ = 8
BATCH = 2
HEAD_DIM = NINP // NHEAD
N = SEQ * BATCH          # folded (seq, batch) rows; row index = s*BATCH + b
VPAD = 128               # vocab padded to full lane width for a dense store
VOCAB_PAD = 64           # vocab padded for the one-hot embedding matmul
NEG_INF = -1e30          # finite stand-in for -inf in masks / padded bias
LN_EPS = 1e-5            # PyTorch LayerNorm default
ATT_SCALE = 1.0 / math.sqrt(HEAD_DIM)

# ------------------------- packed weight-slab layout --------------------------
# Slab A ("w_slab"): all matmul weights, 128 lanes, f32.
WQKV_OFF = 0                                   # (32, 96)  per layer
WO_OFF = 32                                    # (32, 32)
WFF1_OFF = 64                                  # (32, 64)
WFF2_OFF = 96                                  # (64, 32)
W_ROWS_PER_LAYER = 160
DEC_W_OFF = NLAYERS * W_ROWS_PER_LAYER         # 320: (32, 128) padded decoder W
EMB_OFF = DEC_W_OFF + NINP                     # 352: (64, 32) padded, pre-scaled
W_TOTAL_ROWS = EMB_OFF + VOCAB_PAD             # 416

# Slab B ("p_slab"): PE + mask + all biases / LN params + decoder bias.
PE_OFF = 0                                     # (16, 32)
MASK_OFF = N                                   # (16, 16)
BIAS_OFF = 2 * N                               # 8 rows per layer:
#   row 0: bqkv (96)   row 1: bo (32)    row 2: ln1_g (32)  row 3: ln1_b (32)
#   row 4: bff1 (64)   row 5: bff2 (32)  row 6: ln2_g (32)  row 7: ln2_b (32)
DEC_B_OFF = BIAS_OFF + NLAYERS * 8             # 48: (1, 128) padded decoder bias
P_TOTAL_ROWS = 56                              # padded to a sublane multiple


def _vmem():
    return pl.BlockSpec(memory_space=pltpu.MemorySpace.VMEM)


# -----------------------------------------------------------------------------
# Single fused kernel
# -----------------------------------------------------------------------------
def fused_transformer_kernel(ids_ref, w_ref, p_ref, o_ref):
    def layer_norm(y, g, b):
        mu = jnp.mean(y, axis=-1, keepdims=True)
        var = jnp.mean((y - mu) ** 2, axis=-1, keepdims=True)
        return (y - mu) * jax.lax.rsqrt(var + LN_EPS) * g + b

    # ---- embedding lookup as one-hot MXU matmul (table pre-scaled by sqrt(D))
    ids = ids_ref[...]                                                # (N, 1)
    iota = jax.lax.broadcasted_iota(jnp.int32, (N, VOCAB_PAD), 1)
    onehot = (ids == iota).astype(jnp.float32)                        # (N, 64)
    emb = w_ref[EMB_OFF:EMB_OFF + VOCAB_PAD, 0:NINP]                  # (64, 32)
    x = jnp.dot(onehot, emb, preferred_element_type=jnp.float32)      # (N, 32)
    x = x + p_ref[PE_OFF:PE_OFF + N, 0:NINP]       # + PE (dropout = identity)

    mask = p_ref[MASK_OFF:MASK_OFF + N, 0:N]                          # (N, N)

    for l in range(NLAYERS):                    # static unroll (2 layers)
        wrow = l * W_ROWS_PER_LAYER
        br = p_ref[BIAS_OFF + l * 8: BIAS_OFF + (l + 1) * 8, :]       # (8, 128)

        wqkv = w_ref[wrow + WQKV_OFF: wrow + WQKV_OFF + NINP, 0:3 * NINP]
        wo = w_ref[wrow + WO_OFF:   wrow + WO_OFF + NINP,   0:NINP]
        wff1 = w_ref[wrow + WFF1_OFF: wrow + WFF1_OFF + NINP, 0:NHID]
        wff2 = w_ref[wrow + WFF2_OFF: wrow + WFF2_OFF + NHID, 0:NINP]

        bqkv = br[0:1, 0:3 * NINP]
        bo_b = br[1:2, 0:NINP]
        ln1g, ln1b = br[2:3, 0:NINP], br[3:4, 0:NINP]
        bff1 = br[4:5, 0:NHID]
        bff2 = br[5:6, 0:NINP]
        ln2g, ln2b = br[6:7, 0:NINP], br[7:8, 0:NINP]

        # -------- multi-head self-attention (fused QKV, scale pre-folded) ----
        qkv = jnp.dot(x, wqkv, preferred_element_type=jnp.float32) + bqkv
        heads = []
        for h in range(NHEAD):                  # static unroll (2 heads)
            q = qkv[:, h * HEAD_DIM:(h + 1) * HEAD_DIM]
            k = qkv[:, NINP + h * HEAD_DIM: NINP + (h + 1) * HEAD_DIM]
            v = qkv[:, 2 * NINP + h * HEAD_DIM: 2 * NINP + (h + 1) * HEAD_DIM]
            s = jnp.dot(q, k.T, preferred_element_type=jnp.float32) + mask
            m = jnp.max(s, axis=-1, keepdims=True)
            p = jnp.exp(s - m)
            p = p / jnp.sum(p, axis=-1, keepdims=True)      # exact softmax
            heads.append(jnp.dot(p, v, preferred_element_type=jnp.float32))
        attn = jnp.concatenate(heads, axis=-1)                        # (N, 32)
        attn = jnp.dot(attn, wo, preferred_element_type=jnp.float32) + bo_b

        y = layer_norm(x + attn, ln1g, ln1b)

        # -------- feed-forward ------------------------------------------------
        ff = jnp.dot(y, wff1, preferred_element_type=jnp.float32) + bff1
        ff = jnp.maximum(ff, 0.0)                                     # ReLU
        ff = jnp.dot(ff, wff2, preferred_element_type=jnp.float32) + bff2

        x = layer_norm(y + ff, ln2g, ln2b)

    # -------- decoder Linear + log_softmax (lane-dense, vocab padded to 128) --
    dec_w = w_ref[DEC_W_OFF:DEC_W_OFF + NINP, :]                      # (32, 128)
    dec_b = p_ref[DEC_B_OFF:DEC_B_OFF + 1, :]                         # (1, 128)
    logits = jnp.dot(x, dec_w, preferred_element_type=jnp.float32) + dec_b
    m = jnp.max(logits, axis=-1, keepdims=True)
    z = logits - m
    lse = jnp.log(jnp.sum(jnp.exp(z), axis=-1, keepdims=True))
    o_ref[...] = z - lse                                              # (N, 128)


def fused_forward(ids, params):
    return pl.pallas_call(
        fused_transformer_kernel,
        out_shape=jax.ShapeDtypeStruct((N, VPAD), jnp.float32),
        in_specs=[_vmem(), _vmem(), _vmem()],
        out_specs=_vmem(),
    )(ids, params['w_slab'], params['p_slab'])


# -----------------------------------------------------------------------------
# Parameter construction (deterministic, in-script)
# -----------------------------------------------------------------------------
def make_positional_encoding(seq_len, d_model):
    position = jnp.arange(seq_len, dtype=jnp.float32)[:, None]
    div_term = jnp.exp(jnp.arange(0, d_model, 2, dtype=jnp.float32)
                       * (-math.log(10000.0) / d_model))
    pe = jnp.zeros((seq_len, d_model), dtype=jnp.float32)
    pe = pe.at[:, 0::2].set(jnp.sin(position * div_term))
    pe = pe.at[:, 1::2].set(jnp.cos(position * div_term))
    return pe


def make_folded_mask(seq, batch):
    """Additive mask over folded rows (row = s*batch + b): attend only within
       the same batch element and to keys s_j <= s_i."""
    idx = jnp.arange(seq * batch)
    s = idx // batch
    b = idx % batch
    ok = (b[:, None] == b[None, :]) & (s[None, :] <= s[:, None])
    return jnp.where(ok, 0.0, NEG_INF).astype(jnp.float32)


def make_causal_mask(seq):
    i = jnp.arange(seq)
    ok = i[None, :] <= i[:, None]
    return jnp.where(ok, 0.0, NEG_INF).astype(jnp.float32)


def init_params(key):
    keys = jax.random.split(key, 2 + NLAYERS)
    initrange = 0.1

    embedding = jax.random.uniform(keys[0], (NTOKEN, NINP),
                                   minval=-initrange, maxval=initrange,
                                   dtype=jnp.float32)
    dec_w = jax.random.uniform(keys[1], (NINP, NTOKEN),
                               minval=-initrange, maxval=initrange,
                               dtype=jnp.float32)
    dec_b = jnp.zeros((NTOKEN,), jnp.float32)            # torch zeros_ init

    def u(k, shape, fan_in):
        bound = 1.0 / math.sqrt(fan_in)
        return jax.random.uniform(k, shape, minval=-bound, maxval=bound,
                                  dtype=jnp.float32)

    raw = {
        'embedding': embedding, 'dec_w': dec_w, 'dec_b': dec_b,
        'pe': make_positional_encoding(SEQ, NINP),
        'causal': make_causal_mask(SEQ),
        'wqkv': [], 'bqkv': [], 'wo': [], 'bo': [],
        'wff1': [], 'bff1': [], 'wff2': [], 'bff2': [],
        'ln1_g': [], 'ln1_b': [], 'ln2_g': [], 'ln2_b': [],
    }

    for l in range(NLAYERS):
        lk = jax.random.split(keys[2 + l], 8)
        raw['wqkv'].append(u(lk[0], (NINP, 3 * NINP), NINP))   # in_proj_weight.T
        raw['bqkv'].append(u(lk[1], (3 * NINP,), NINP))
        raw['wo'].append(u(lk[2], (NINP, NINP), NINP))         # out_proj.weight.T
        raw['bo'].append(u(lk[3], (NINP,), NINP))
        raw['wff1'].append(u(lk[4], (NINP, NHID), NINP))       # linear1.weight.T
        raw['bff1'].append(u(lk[5], (NHID,), NINP))
        raw['wff2'].append(u(lk[6], (NHID, NINP), NHID))       # linear2.weight.T
        raw['bff2'].append(u(lk[7], (NINP,), NHID))
        raw['ln1_g'].append(jnp.ones((NINP,), jnp.float32))
        raw['ln1_b'].append(jnp.zeros((NINP,), jnp.float32))
        raw['ln2_g'].append(jnp.ones((NINP,), jnp.float32))
        raw['ln2_b'].append(jnp.zeros((NINP,), jnp.float32))

    for k in ('wqkv', 'bqkv', 'wo', 'bo', 'wff1', 'bff1', 'wff2', 'bff2',
              'ln1_g', 'ln1_b', 'ln2_g', 'ln2_b'):
        raw[k] = jnp.stack(raw[k])

    # ---------------- weight slab (slab A) ----------------
    w_slab = jnp.zeros((W_TOTAL_ROWS, VPAD), jnp.float32)
    for l in range(NLAYERS):
        base = l * W_ROWS_PER_LAYER
        # fold the 1/sqrt(head_dim) attention scale into the Q weight columns
        wqkv_scaled = raw['wqkv'][l].at[:, :NINP].multiply(ATT_SCALE)
        w_slab = w_slab.at[base + WQKV_OFF:base + WQKV_OFF + NINP,
                           0:3 * NINP].set(wqkv_scaled)
        w_slab = w_slab.at[base + WO_OFF:base + WO_OFF + NINP,
                           0:NINP].set(raw['wo'][l])
        w_slab = w_slab.at[base + WFF1_OFF:base + WFF1_OFF + NINP,
                           0:NHID].set(raw['wff1'][l])
        w_slab = w_slab.at[base + WFF2_OFF:base + WFF2_OFF + NHID,
                           0:NINP].set(raw['wff2'][l])
    w_slab = w_slab.at[DEC_W_OFF:DEC_W_OFF + NINP, 0:NTOKEN].set(dec_w)
    # embedding table pre-scaled by sqrt(d_model); padded rows stay zero
    w_slab = w_slab.at[EMB_OFF:EMB_OFF + NTOKEN, 0:NINP].set(
        embedding * math.sqrt(NINP))

    # ---------------- bias / PE / mask slab (slab B) ----------------
    p_slab = jnp.zeros((P_TOTAL_ROWS, VPAD), jnp.float32)
    pe_slab = jnp.repeat(raw['pe'], BATCH, axis=0)               # (S*B, D)
    p_slab = p_slab.at[PE_OFF:PE_OFF + N, 0:NINP].set(pe_slab)
    p_slab = p_slab.at[MASK_OFF:MASK_OFF + N, 0:N].set(make_folded_mask(SEQ, BATCH))
    for l in range(NLAYERS):
        b0 = BIAS_OFF + l * 8
        bqkv_scaled = raw['bqkv'][l].at[:NINP].multiply(ATT_SCALE)
        p_slab = p_slab.at[b0 + 0, 0:3 * NINP].set(bqkv_scaled)
        p_slab = p_slab.at[b0 + 1, 0:NINP].set(raw['bo'][l])
        p_slab = p_slab.at[b0 + 2, 0:NINP].set(raw['ln1_g'][l])
        p_slab = p_slab.at[b0 + 3, 0:NINP].set(raw['ln1_b'][l])
        p_slab = p_slab.at[b0 + 4, 0:NHID].set(raw['bff1'][l])
        p_slab = p_slab.at[b0 + 5, 0:NINP].set(raw['bff2'][l])
        p_slab = p_slab.at[b0 + 6, 0:NINP].set(raw['ln2_g'][l])
        p_slab = p_slab.at[b0 + 7, 0:NINP].set(raw['ln2_b'][l])
    # decoder bias: real vocab cols = 0 (torch init), padded cols = NEG_INF so
    # they never affect the log_softmax max/sum.
    dec_b_row = jnp.full((VPAD,), NEG_INF, jnp.float32).at[:NTOKEN].set(dec_b)
    p_slab = p_slab.at[DEC_B_OFF, :].set(dec_b_row)

    return {'w_slab': w_slab, 'p_slab': p_slab, 'raw': raw}


# -----------------------------------------------------------------------------
# Full forward pass (PyTorch convention: src [S, B] -> log_probs [S, B, V])
# -----------------------------------------------------------------------------
@jax.jit
def transformer_forward(tokens, params):
    ids = tokens.reshape(N, 1).astype(jnp.int32)    # folded row order s*B+b
    out = fused_forward(ids, params)                # (S*B, VPAD), single kernel
    return out.reshape(SEQ, BATCH, VPAD)[:, :, :NTOKEN]


# -----------------------------------------------------------------------------
# Pure-JAX reference (mirrors the PyTorch module; eval-mode dropout)
# -----------------------------------------------------------------------------
def reference_forward(tokens, params):
    raw = params['raw']

    def layer_norm(y, g, b):
        mu = jnp.mean(y, axis=-1, keepdims=True)
        var = jnp.mean((y - mu) ** 2, axis=-1, keepdims=True)
        return (y - mu) * jax.lax.rsqrt(var + LN_EPS) * g + b

    causal = raw['causal']
    x = raw['embedding'][tokens] * math.sqrt(NINP)          # (S, B, D)
    x = x + raw['pe'][:, None, :]
    outs = []
    for b in range(BATCH):
        xb = x[:, b, :]
        for l in range(NLAYERS):
            qkv = xb @ raw['wqkv'][l] + raw['bqkv'][l]
            q, k, v = qkv[:, :NINP], qkv[:, NINP:2 * NINP], qkv[:, 2 * NINP:]
            heads = []
            for h in range(NHEAD):
                sl = slice(h * HEAD_DIM, (h + 1) * HEAD_DIM)
                s = (q[:, sl] * ATT_SCALE) @ k[:, sl].T + causal
                p = jax.nn.softmax(s, axis=-1)
                heads.append(p @ v[:, sl])
            attn = jnp.concatenate(heads, -1) @ raw['wo'][l] + raw['bo'][l]
            y = layer_norm(xb + attn, raw['ln1_g'][l], raw['ln1_b'][l])
            ff = jnp.maximum(y @ raw['wff1'][l] + raw['bff1'][l], 0.0)
            ff = ff @ raw['wff2'][l] + raw['bff2'][l]
            xb = layer_norm(y + ff, raw['ln2_g'][l], raw['ln2_b'][l])
        logits = xb @ raw['dec_w'] + raw['dec_b']
        outs.append(jax.nn.log_softmax(logits, axis=-1))
    return jnp.stack(outs, axis=1)                          # (S, B, V)


if __name__ == "__main__":
    key = jax.random.PRNGKey(0)
    pkey, tkey = jax.random.split(key)
    params = init_params(pkey)
    src = jax.random.randint(tkey, (SEQ, BATCH), 0, NTOKEN, dtype=jnp.int32)

    out = jax.block_until_ready(transformer_forward(src, params))

    assert out.shape == (SEQ, BATCH, NTOKEN), out.shape
    assert bool(jnp.all(jnp.isfinite(out)))
    # log_softmax rows should exp-sum to ~1
    row_sums = jnp.sum(jnp.exp(out), axis=-1)
    assert bool(jnp.all(jnp.abs(row_sums - 1.0) < 1e-3))
    # parity with a pure-JAX reference of the PyTorch forward
    ref = reference_forward(src, params)
    max_err = float(jnp.max(jnp.abs(out - ref)))
    assert max_err < 2e-3, f"max |kernel - ref| = {max_err}"
    print("KERNEL_OK")
</pallas_src>

<mosaic_0001>
module attributes {stable_mosaic.version = 11 : i64} {
  func.func @fused_transformer_kernel(%arg0: memref<16x1xi32, #tpu.memory_space<vmem>>, %arg1: memref<416x128xf32, #tpu.memory_space<vmem>>, %arg2: memref<56x128xf32, #tpu.memory_space<vmem>>, %arg3: memref<16x128xf32, #tpu.memory_space<vmem>>) attributes {dimension_semantics = [], scalar_prefetch = 0 : i64, scratch_operands = 0 : i64, tpu.core_type = #tpu.core_type<tc>} {
    %c0 = arith.constant 0 : index
    %c0_0 = arith.constant 0 : index
    %0 = vector.load %arg0[%c0, %c0_0] : memref<16x1xi32, #tpu.memory_space<vmem>>, vector<16x1xi32>
    %1 = tpu.iota {dimensions = array<i32: 1>} : vector<16x64xi32>
    %2 = vector.broadcast %0 : vector<16x1xi32> to vector<16x64xi32>
    %3 = arith.cmpi eq, %2, %1 : vector<16x64xi32>
    %4 = arith.extui %3 : vector<16x64xi1> to vector<16x64xi32>
    %5 = arith.sitofp %4 : vector<16x64xi32> to vector<16x64xf32>
    %c352 = arith.constant 352 : index
    %c0_1 = arith.constant 0 : index
    %6 = vector.load %arg1[%c352, %c0_1] : memref<416x128xf32, #tpu.memory_space<vmem>>, vector<64x32xf32>
    %cst = arith.constant dense<0.000000e+00> : vector<16x32xf32>
    %7 = tpu.matmul %5, %6, %cst {dimension_numbers = #tpu.dot_dimension_numbers<[1], [0], [0], [1], [0, 0, 1, 1], [], []>} : vector<16x64xf32>, vector<64x32xf32>, vector<16x32xf32> -> vector<16x32xf32>
    %c0_2 = arith.constant 0 : index
    %c0_3 = arith.constant 0 : index
    %8 = vector.load %arg2[%c0_2, %c0_3] : memref<56x128xf32, #tpu.memory_space<vmem>>, vector<16x32xf32>
    %9 = arith.addf %7, %8 : vector<16x32xf32>
    %c16 = arith.constant 16 : index
    %c0_4 = arith.constant 0 : index
    %10 = vector.load %arg2[%c16, %c0_4] : memref<56x128xf32, #tpu.memory_space<vmem>>, vector<16x16xf32>
    %c32 = arith.constant 32 : index
    %c0_5 = arith.constant 0 : index
    %11 = vector.load %arg2[%c32, %c0_5] : memref<56x128xf32, #tpu.memory_space<vmem>>, vector<8x128xf32>
    %c0_6 = arith.constant 0 : index
    %c0_7 = arith.constant 0 : index
    %12 = vector.load %arg1[%c0_6, %c0_7] : memref<416x128xf32, #tpu.memory_space<vmem>>, vector<32x96xf32>
    %c32_8 = arith.constant 32 : index
    %c0_9 = arith.constant 0 : index
    %13 = vector.load %arg1[%c32_8, %c0_9] : memref<416x128xf32, #tpu.memory_space<vmem>>, vector<32x32xf32>
    %c64 = arith.constant 64 : index
    %c0_10 = arith.constant 0 : index
    %14 = vector.load %arg1[%c64, %c0_10] : memref<416x128xf32, #tpu.memory_space<vmem>>, vector<32x64xf32>
    %c96 = arith.constant 96 : index
    %c0_11 = arith.constant 0 : index
    %15 = vector.load %arg1[%c96, %c0_11] : memref<416x128xf32, #tpu.memory_space<vmem>>, vector<64x32xf32>
    %16 = vector.extract_strided_slice %11 {offsets = [0, 0], sizes = [1, 96], strides = [1, 1]} : vector<8x128xf32> to vector<1x96xf32>
    %17 = vector.extract_strided_slice %11 {offsets = [1, 0], sizes = [1, 32], strides = [1, 1]} : vector<8x128xf32> to vector<1x32xf32>
    %18 = vector.extract_strided_slice %11 {offsets = [2, 0], sizes = [1, 32], strides = [1, 1]} : vector<8x128xf32> to vector<1x32xf32>
    %19 = vector.extract_strided_slice %11 {offsets = [3, 0], sizes = [1, 32], strides = [1, 1]} : vector<8x128xf32> to vector<1x32xf32>
    %20 = vector.extract_strided_slice %11 {offsets = [4, 0], sizes = [1, 64], strides = [1, 1]} : vector<8x128xf32> to vector<1x64xf32>
    %21 = vector.extract_strided_slice %11 {offsets = [5, 0], sizes = [1, 32], strides = [1, 1]} : vector<8x128xf32> to vector<1x32xf32>
    %22 = vector.extract_strided_slice %11 {offsets = [6, 0], sizes = [1, 32], strides = [1, 1]} : vector<8x128xf32> to vector<1x32xf32>
    %23 = vector.extract_strided_slice %11 {offsets = [7, 0], sizes = [1, 32], strides = [1, 1]} : vector<8x128xf32> to vector<1x32xf32>
    %cst_12 = arith.constant dense<0.000000e+00> : vector<16x96xf32>
    %24 = tpu.matmul %9, %12, %cst_12 {dimension_numbers = #tpu.dot_dimension_numbers<[1], [0], [0], [1], [0, 0, 1, 1], [], []>} : vector<16x32xf32>, vector<32x96xf32>, vector<16x96xf32> -> vector<16x96xf32>
    %25 = vector.broadcast %16 : vector<1x96xf32> to vector<16x96xf32>
    %26 = arith.addf %24, %25 : vector<16x96xf32>
    %27 = vector.extract_strided_slice %26 {offsets = [0, 0], sizes = [16, 16], strides = [1, 1]} : vector<16x96xf32> to vector<16x16xf32>
    %28 = vector.extract_strided_slice %26 {offsets = [0, 32], sizes = [16, 16], strides = [1, 1]} : vector<16x96xf32> to vector<16x16xf32>
    %29 = vector.extract_strided_slice %26 {offsets = [0, 64], sizes = [16, 16], strides = [1, 1]} : vector<16x96xf32> to vector<16x16xf32>
    %30 = tpu.transpose %28, [1, 0] : vector<16x16xf32> -> vector<16x16xf32>
    %cst_13 = arith.constant dense<0.000000e+00> : vector<16x16xf32>
    %31 = tpu.matmul %27, %30, %cst_13 {dimension_numbers = #tpu.dot_dimension_numbers<[1], [0], [0], [1], [0, 0, 1, 1], [], []>} : vector<16x16xf32>, vector<16x16xf32>, vector<16x16xf32> -> vector<16x16xf32>
    %32 = arith.addf %31, %10 : vector<16x16xf32>
    %cst_14 = arith.constant dense<0xFF800000> : vector<16xf32>
    %33 = vector.multi_reduction <maximumf>, %32, %cst_14 [1] : vector<16x16xf32> to vector<16xf32>
    %34 = vector.shape_cast %33 : vector<16xf32> to vector<16x1xf32>
    %35 = vector.broadcast %34 : vector<16x1xf32> to vector<16x16xf32>
    %36 = arith.subf %32, %35 : vector<16x16xf32>
    %37 = math.exp %36 : vector<16x16xf32>
    %cst_15 = arith.constant dense<0.000000e+00> : vector<16xf32>
    %38 = vector.multi_reduction <add>, %37, %cst_15 [1] : vector<16x16xf32> to vector<16xf32>
    %39 = vector.shape_cast %38 : vector<16xf32> to vector<16x1xf32>
    %40 = vector.broadcast %39 : vector<16x1xf32> to vector<16x16xf32>
    %41 = arith.divf %37, %40 : vector<16x16xf32>
    %cst_16 = arith.constant dense<0.000000e+00> : vector<16x16xf32>
    %42 = tpu.matmul %41, %29, %cst_16 {dimension_numbers = #tpu.dot_dimension_numbers<[1], [0], [0], [1], [0, 0, 1, 1], [], []>} : vector<16x16xf32>, vector<16x16xf32>, vector<16x16xf32> -> vector<16x16xf32>
    %43 = vector.extract_strided_slice %26 {offsets = [0, 16], sizes = [16, 16], strides = [1, 1]} : vector<16x96xf32> to vector<16x16xf32>
    %44 = vector.extract_strided_slice %26 {offsets = [0, 48], sizes = [16, 16], strides = [1, 1]} : vector<16x96xf32> to vector<16x16xf32>
    %45 = vector.extract_strided_slice %26 {offsets = [0, 80], sizes = [16, 16], strides = [1, 1]} : vector<16x96xf32> to vector<16x16xf32>
    %46 = tpu.transpose %44, [1, 0] : vector<16x16xf32> -> vector<16x16xf32>
    %cst_17 = arith.constant dense<0.000000e+00> : vector<16x16xf32>
    %47 = tpu.matmul %43, %46, %cst_17 {dimension_numbers = #tpu.dot_dimension_numbers<[1], [0], [0], [1], [0, 0, 1, 1], [], []>} : vector<16x16xf32>, vector<16x16xf32>, vector<16x16xf32> -> vector<16x16xf32>
    %48 = arith.addf %47, %10 : vector<16x16xf32>
    %cst_18 = arith.constant dense<0xFF800000> : vector<16xf32>
    %49 = vector.multi_reduction <maximumf>, %48, %cst_18 [1] : vector<16x16xf32> to vector<16xf32>
    %50 = vector.shape_cast %49 : vector<16xf32> to vector<16x1xf32>
    %51 = vector.broadcast %50 : vector<16x1xf32> to vector<16x16xf32>
    %52 = arith.subf %48, %51 : vector<16x16xf32>
    %53 = math.exp %52 : vector<16x16xf32>
    %cst_19 = arith.constant dense<0.000000e+00> : vector<16xf32>
    %54 = vector.multi_reduction <add>, %53, %cst_19 [1] : vector<16x16xf32> to vector<16xf32>
    %55 = vector.shape_cast %54 : vector<16xf32> to vector<16x1xf32>
    %56 = vector.broadcast %55 : vector<16x1xf32> to vector<16x16xf32>
    %57 = arith.divf %53, %56 : vector<16x16xf32>
    %cst_20 = arith.constant dense<0.000000e+00> : vector<16x16xf32>
    %58 = tpu.matmul %57, %45, %cst_20 {dimension_numbers = #tpu.dot_dimension_numbers<[1], [0], [0], [1], [0, 0, 1, 1], [], []>} : vector<16x16xf32>, vector<16x16xf32>, vector<16x16xf32> -> vector<16x16xf32>
    %59 = tpu.concatenate %42, %58 in 1 : vector<16x16xf32>, vector<16x16xf32> -> vector<16x32xf32>
    %cst_21 = arith.constant dense<0.000000e+00> : vector<16x32xf32>
    %60 = tpu.matmul %59, %13, %cst_21 {dimension_numbers = #tpu.dot_dimension_numbers<[1], [0], [0], [1], [0, 0, 1, 1], [], []>} : vector<16x32xf32>, vector<32x32xf32>, vector<16x32xf32> -> vector<16x32xf32>
    %61 = vector.broadcast %17 : vector<1x32xf32> to vector<16x32xf32>
    %62 = arith.addf %60, %61 : vector<16x32xf32>
    %63 = arith.addf %9, %62 : vector<16x32xf32>
    %cst_22 = arith.constant dense<0.000000e+00> : vector<16xf32>
    %64 = vector.multi_reduction <add>, %63, %cst_22 [1] : vector<16x32xf32> to vector<16xf32>
    %65 = vector.shape_cast %64 : vector<16xf32> to vector<16x1xf32>
    %cst_23 = arith.constant 3.200000e+01 : f32
    %66 = vector.broadcast %cst_23 : f32 to vector<16x1xf32>
    %67 = arith.divf %65, %66 : vector<16x1xf32>
    %68 = vector.broadcast %67 : vector<16x1xf32> to vector<16x32xf32>
    %69 = arith.subf %63, %68 : vector<16x32xf32>
    %70 = arith.mulf %69, %69 : vector<16x32xf32>
    %cst_24 = arith.constant dense<0.000000e+00> : vector<16xf32>
    %71 = vector.multi_reduction <add>, %70, %cst_24 [1] : vector<16x32xf32> to vector<16xf32>
    %72 = vector.shape_cast %71 : vector<16xf32> to vector<16x1xf32>
    %cst_25 = arith.constant 3.200000e+01 : f32
    %73 = vector.broadcast %cst_25 : f32 to vector<16x1xf32>
    %74 = arith.divf %72, %73 : vector<16x1xf32>
    %75 = vector.broadcast %67 : vector<16x1xf32> to vector<16x32xf32>
    %76 = arith.subf %63, %75 : vector<16x32xf32>
    %cst_26 = arith.constant 9.99999974E-6 : f32
    %77 = vector.broadcast %cst_26 : f32 to vector<16x1xf32>
    %78 = arith.addf %74, %77 : vector<16x1xf32>
    %79 = math.rsqrt %78 : vector<16x1xf32>
    %80 = vector.broadcast %79 : vector<16x1xf32> to vector<16x32xf32>
    %81 = arith.mulf %76, %80 : vector<16x32xf32>
    %82 = vector.broadcast %18 : vector<1x32xf32> to vector<16x32xf32>
    %83 = arith.mulf %81, %82 : vector<16x32xf32>
    %84 = vector.broadcast %19 : vector<1x32xf32> to vector<16x32xf32>
    %85 = arith.addf %83, %84 : vector<16x32xf32>
    %cst_27 = arith.constant dense<0.000000e+00> : vector<16x64xf32>
    %86 = tpu.matmul %85, %14, %cst_27 {dimension_numbers = #tpu.dot_dimension_numbers<[1], [0], [0], [1], [0, 0, 1, 1], [], []>} : vector<16x32xf32>, vector<32x64xf32>, vector<16x64xf32> -> vector<16x64xf32>
    %87 = vector.broadcast %20 : vector<1x64xf32> to vector<16x64xf32>
    %88 = arith.addf %86, %87 : vector<16x64xf32>
    %cst_28 = arith.constant 0.000000e+00 : f32
    %89 = vector.broadcast %cst_28 : f32 to vector<16x64xf32>
    %90 = arith.maximumf %88, %89 : vector<16x64xf32>
    %cst_29 = arith.constant dense<0.000000e+00> : vector<16x32xf32>
    %91 = tpu.matmul %90, %15, %cst_29 {dimension_numbers = #tpu.dot_dimension_numbers<[1], [0], [0], [1], [0, 0, 1, 1], [], []>} : vector<16x64xf32>, vector<64x32xf32>, vector<16x32xf32> -> vector<16x32xf32>
    %92 = vector.broadcast %21 : vector<1x32xf32> to vector<16x32xf32>
    %93 = arith.addf %91, %92 : vector<16x32xf32>
    %94 = arith.addf %85, %93 : vector<16x32xf32>
    %cst_30 = arith.constant dense<0.000000e+00> : vector<16xf32>
    %95 = vector.multi_reduction <add>, %94, %cst_30 [1] : vector<16x32xf32> to vector<16xf32>
    %96 = vector.shape_cast %95 : vector<16xf32> to vector<16x1xf32>
    %cst_31 = arith.constant 3.200000e+01 : f32
    %97 = vector.broadcast %cst_31 : f32 to vector<16x1xf32>
    %98 = arith.divf %96, %97 : vector<16x1xf32>
    %99 = vector.broadcast %98 : vector<16x1xf32> to vector<16x32xf32>
    %100 = arith.subf %94, %99 : vector<16x32xf32>
    %101 = arith.mulf %100, %100 : vector<16x32xf32>
    %cst_32 = arith.constant dense<0.000000e+00> : vector<16xf32>
    %102 = vector.multi_reduction <add>, %101, %cst_32 [1] : vector<16x32xf32> to vector<16xf32>
    %103 = vector.shape_cast %102 : vector<16xf32> to vector<16x1xf32>
    %cst_33 = arith.constant 3.200000e+01 : f32
    %104 = vector.broadcast %cst_33 : f32 to vector<16x1xf32>
    %105 = arith.divf %103, %104 : vector<16x1xf32>
    %106 = vector.broadcast %98 : vector<16x1xf32> to vector<16x32xf32>
    %107 = arith.subf %94, %106 : vector<16x32xf32>
    %cst_34 = arith.constant 9.99999974E-6 : f32
    %108 = vector.broadcast %cst_34 : f32 to vector<16x1xf32>
    %109 = arith.addf %105, %108 : vector<16x1xf32>
    %110 = math.rsqrt %109 : vector<16x1xf32>
    %111 = vector.broadcast %110 : vector<16x1xf32> to vector<16x32xf32>
    %112 = arith.mulf %107, %111 : vector<16x32xf32>
    %113 = vector.broadcast %22 : vector<1x32xf32> to vector<16x32xf32>
    %114 = arith.mulf %112, %113 : vector<16x32xf32>
    %115 = vector.broadcast %23 : vector<1x32xf32> to vector<16x32xf32>
    %116 = arith.addf %114, %115 : vector<16x32xf32>
    %c40 = arith.constant 40 : index
    %c0_35 = arith.constant 0 : index
    %117 = vector.load %arg2[%c40, %c0_35] : memref<56x128xf32, #tpu.memory_space<vmem>>, vector<8x128xf32>
    %c160 = arith.constant 160 : index
    %c0_36 = arith.constant 0 : index
    %118 = vector.load %arg1[%c160, %c0_36] : memref<416x128xf32, #tpu.memory_space<vmem>>, vector<32x96xf32>
    %c192 = arith.constant 192 : index
    %c0_37 = arith.constant 0 : index
    %119 = vector.load %arg1[%c192, %c0_37] : memref<416x128xf32, #tpu.memory_space<vmem>>, vector<32x32xf32>
    %c224 = arith.constant 224 : index
    %c0_38 = arith.constant 0 : index
    %120 = vector.load %arg1[%c224, %c0_38] : memref<416x128xf32, #tpu.memory_space<vmem>>, vector<32x64xf32>
    %c256 = arith.constant 256 : index
    %c0_39 = arith.constant 0 : index
    %121 = vector.load %arg1[%c256, %c0_39] : memref<416x128xf32, #tpu.memory_space<vmem>>, vector<64x32xf32>
    %122 = vector.extract_strided_slice %117 {offsets = [0, 0], sizes = [1, 96], strides = [1, 1]} : vector<8x128xf32> to vector<1x96xf32>
    %123 = vector.extract_strided_slice %117 {offsets = [1, 0], sizes = [1, 32], strides = [1, 1]} : vector<8x128xf32> to vector<1x32xf32>
    %124 = vector.extract_strided_slice %117 {offsets = [2, 0], sizes = [1, 32], strides = [1, 1]} : vector<8x128xf32> to vector<1x32xf32>
    %125 = vector.extract_strided_slice %117 {offsets = [3, 0], sizes = [1, 32], strides = [1, 1]} : vector<8x128xf32> to vector<1x32xf32>
    %126 = vector.extract_strided_slice %117 {offsets = [4, 0], sizes = [1, 64], strides = [1, 1]} : vector<8x128xf32> to vector<1x64xf32>
    %127 = vector.extract_strided_slice %117 {offsets = [5, 0], sizes = [1, 32], strides = [1, 1]} : vector<8x128xf32> to vector<1x32xf32>
    %128 = vector.extract_strided_slice %117 {offsets = [6, 0], sizes = [1, 32], strides = [1, 1]} : vector<8x128xf32> to vector<1x32xf32>
    %129 = vector.extract_strided_slice %117 {offsets = [7, 0], sizes = [1, 32], strides = [1, 1]} : vector<8x128xf32> to vector<1x32xf32>
    %cst_40 = arith.constant dense<0.000000e+00> : vector<16x96xf32>
    %130 = tpu.matmul %116, %118, %cst_40 {dimension_numbers = #tpu.dot_dimension_numbers<[1], [0], [0], [1], [0, 0, 1, 1], [], []>} : vector<16x32xf32>, vector<32x96xf32>, vector<16x96xf32> -> vector<16x96xf32>
    %131 = vector.broadcast %122 : vector<1x96xf32> to vector<16x96xf32>
    %132 = arith.addf %130, %131 : vector<16x96xf32>
    %133 = vector.extract_strided_slice %132 {offsets = [0, 0], sizes = [16, 16], strides = [1, 1]} : vector<16x96xf32> to vector<16x16xf32>
    %134 = vector.extract_strided_slice %132 {offsets = [0, 32], sizes = [16, 16], strides = [1, 1]} : vector<16x96xf32> to vector<16x16xf32>
    %135 = vector.extract_strided_slice %132 {offsets = [0, 64], sizes = [16, 16], strides = [1, 1]} : vector<16x96xf32> to vector<16x16xf32>
    %136 = tpu.transpose %134, [1, 0] : vector<16x16xf32> -> vector<16x16xf32>
    %cst_41 = arith.constant dense<0.000000e+00> : vector<16x16xf32>
    %137 = tpu.matmul %133, %136, %cst_41 {dimension_numbers = #tpu.dot_dimension_numbers<[1], [0], [0], [1], [0, 0, 1, 1], [], []>} : vector<16x16xf32>, vector<16x16xf32>, vector<16x16xf32> -> vector<16x16xf32>
    %138 = arith.addf %137, %10 : vector<16x16xf32>
    %cst_42 = arith.constant dense<0xFF800000> : vector<16xf32>
    %139 = vector.multi_reduction <maximumf>, %138, %cst_42 [1] : vector<16x16xf32> to vector<16xf32>
    %140 = vector.shape_cast %139 : vector<16xf32> to vector<16x1xf32>
    %141 = vector.broadcast %140 : vector<16x1xf32> to vector<16x16xf32>
    %142 = arith.subf %138, %141 : vector<16x16xf32>
    %143 = math.exp %142 : vector<16x16xf32>
    %cst_43 = arith.constant dense<0.000000e+00> : vector<16xf32>
    %144 = vector.multi_reduction <add>, %143, %cst_43 [1] : vector<16x16xf32> to vector<16xf32>
    %145 = vector.shape_cast %144 : vector<16xf32> to vector<16x1xf32>
    %146 = vector.broadcast %145 : vector<16x1xf32> to vector<16x16xf32>
    %147 = arith.divf %143, %146 : vector<16x16xf32>
    %cst_44 = arith.constant dense<0.000000e+00> : vector<16x16xf32>
    %148 = tpu.matmul %147, %135, %cst_44 {dimension_numbers = #tpu.dot_dimension_numbers<[1], [0], [0], [1], [0, 0, 1, 1], [], []>} : vector<16x16xf32>, vector<16x16xf32>, vector<16x16xf32> -> vector<16x16xf32>
    %149 = vector.extract_strided_slice %132 {offsets = [0, 16], sizes = [16, 16], strides = [1, 1]} : vector<16x96xf32> to vector<16x16xf32>
    %150 = vector.extract_strided_slice %132 {offsets = [0, 48], sizes = [16, 16], strides = [1, 1]} : vector<16x96xf32> to vector<16x16xf32>
    %151 = vector.extract_strided_slice %132 {offsets = [0, 80], sizes = [16, 16], strides = [1, 1]} : vector<16x96xf32> to vector<16x16xf32>
    %152 = tpu.transpose %150, [1, 0] : vector<16x16xf32> -> vector<16x16xf32>
    %cst_45 = arith.constant dense<0.000000e+00> : vector<16x16xf32>
    %153 = tpu.matmul %149, %152, %cst_45 {dimension_numbers = #tpu.dot_dimension_numbers<[1], [0], [0], [1], [0, 0, 1, 1], [], []>} : vector<16x16xf32>, vector<16x16xf32>, vector<16x16xf32> -> vector<16x16xf32>
    %154 = arith.addf %153, %10 : vector<16x16xf32>
    %cst_46 = arith.constant dense<0xFF800000> : vector<16xf32>
    %155 = vector.multi_reduction <maximumf>, %154, %cst_46 [1] : vector<16x16xf32> to vector<16xf32>
    %156 = vector.shape_cast %155 : vector<16xf32> to vector<16x1xf32>
    %157 = vector.broadcast %156 : vector<16x1xf32> to vector<16x16xf32>
    %158 = arith.subf %154, %157 : vector<16x16xf32>
    %159 = math.exp %158 : vector<16x16xf32>
    %cst_47 = arith.constant dense<0.000000e+00> : vector<16xf32>
    %160 = vector.multi_reduction <add>, %159, %cst_47 [1] : vector<16x16xf32> to vector<16xf32>
    %161 = vector.shape_cast %160 : vector<16xf32> to vector<16x1xf32>
    %162 = vector.broadcast %161 : vector<16x1xf32> to vector<16x16xf32>
    %163 = arith.divf %159, %162 : vector<16x16xf32>
    %cst_48 = arith.constant dense<0.000000e+00> : vector<16x16xf32>
    %164 = tpu.matmul %163, %151, %cst_48 {dimension_numbers = #tpu.dot_dimension_numbers<[1], [0], [0], [1], [0, 0, 1, 1], [], []>} : vector<16x16xf32>, vector<16x16xf32>, vector<16x16xf32> -> vector<16x16xf32>
    %165 = tpu.concatenate %148, %164 in 1 : vector<16x16xf32>, vector<16x16xf32> -> vector<16x32xf32>
    %cst_49 = arith.constant dense<0.000000e+00> : vector<16x32xf32>
    %166 = tpu.matmul %165, %119, %cst_49 {dimension_numbers = #tpu.dot_dimension_numbers<[1], [0], [0], [1], [0, 0, 1, 1], [], []>} : vector<16x32xf32>, vector<32x32xf32>, vector<16x32xf32> -> vector<16x32xf32>
    %167 = vector.broadcast %123 : vector<1x32xf32> to vector<16x32xf32>
    %168 = arith.addf %166, %167 : vector<16x32xf32>
    %169 = arith.addf %116, %168 : vector<16x32xf32>
    %cst_50 = arith.constant dense<0.000000e+00> : vector<16xf32>
    %170 = vector.multi_reduction <add>, %169, %cst_50 [1] : vector<16x32xf32> to vector<16xf32>
    %171 = vector.shape_cast %170 : vector<16xf32> to vector<16x1xf32>
    %cst_51 = arith.constant 3.200000e+01 : f32
    %172 = vector.broadcast %cst_51 : f32 to vector<16x1xf32>
    %173 = arith.divf %171, %172 : vector<16x1xf32>
    %174 = vector.broadcast %173 : vector<16x1xf32> to vector<16x32xf32>
    %175 = arith.subf %169, %174 : vector<16x32xf32>
    %176 = arith.mulf %175, %175 : vector<16x32xf32>
    %cst_52 = arith.constant dense<0.000000e+00> : vector<16xf32>
    %177 = vector.multi_reduction <add>, %176, %cst_52 [1] : vector<16x32xf32> to vector<16xf32>
    %178 = vector.shape_cast %177 : vector<16xf32> to vector<16x1xf32>
    %cst_53 = arith.constant 3.200000e+01 : f32
    %179 = vector.broadcast %cst_53 : f32 to vector<16x1xf32>
    %180 = arith.divf %178, %179 : vector<16x1xf32>
    %181 = vector.broadcast %173 : vector<16x1xf32> to vector<16x32xf32>
    %182 = arith.subf %169, %181 : vector<16x32xf32>
    %cst_54 = arith.constant 9.99999974E-6 : f32
    %183 = vector.broadcast %cst_54 : f32 to vector<16x1xf32>
    %184 = arith.addf %180, %183 : vector<16x1xf32>
    %185 = math.rsqrt %184 : vector<16x1xf32>
    %186 = vector.broadcast %185 : vector<16x1xf32> to vector<16x32xf32>
    %187 = arith.mulf %182, %186 : vector<16x32xf32>
    %188 = vector.broadcast %124 : vector<1x32xf32> to vector<16x32xf32>
    %189 = arith.mulf %187, %188 : vector<16x32xf32>
    %190 = vector.broadcast %125 : vector<1x32xf32> to vector<16x32xf32>
    %191 = arith.addf %189, %190 : vector<16x32xf32>
    %cst_55 = arith.constant dense<0.000000e+00> : vector<16x64xf32>
    %192 = tpu.matmul %191, %120, %cst_55 {dimension_numbers = #tpu.dot_dimension_numbers<[1], [0], [0], [1], [0, 0, 1, 1], [], []>} : vector<16x32xf32>, vector<32x64xf32>, vector<16x64xf32> -> vector<16x64xf32>
    %193 = vector.broadcast %126 : vector<1x64xf32> to vector<16x64xf32>
    %194 = arith.addf %192, %193 : vector<16x64xf32>
    %cst_56 = arith.constant 0.000000e+00 : f32
    %195 = vector.broadcast %cst_56 : f32 to vector<16x64xf32>
    %196 = arith.maximumf %194, %195 : vector<16x64xf32>
    %cst_57 = arith.constant dense<0.000000e+00> : vector<16x32xf32>
    %197 = tpu.matmul %196, %121, %cst_57 {dimension_numbers = #tpu.dot_dimension_numbers<[1], [0], [0], [1], [0, 0, 1, 1], [], []>} : vector<16x64xf32>, vector<64x32xf32>, vector<16x32xf32> -> vector<16x32xf32>
    %198 = vector.broadcast %127 : vector<1x32xf32> to vector<16x32xf32>
    %199 = arith.addf %197, %198 : vector<16x32xf32>
    %200 = arith.addf %191, %199 : vector<16x32xf32>
    %cst_58 = arith.constant dense<0.000000e+00> : vector<16xf32>
    %201 = vector.multi_reduction <add>, %200, %cst_58 [1] : vector<16x32xf32> to vector<16xf32>
    %202 = vector.shape_cast %201 : vector<16xf32> to vector<16x1xf32>
    %cst_59 = arith.constant 3.200000e+01 : f32
    %203 = vector.broadcast %cst_59 : f32 to vector<16x1xf32>
    %204 = arith.divf %202, %203 : vector<16x1xf32>
    %205 = vector.broadcast %204 : vector<16x1xf32> to vector<16x32xf32>
    %206 = arith.subf %200, %205 : vector<16x32xf32>
    %207 = arith.mulf %206, %206 : vector<16x32xf32>
    %cst_60 = arith.constant dense<0.000000e+00> : vector<16xf32>
    %208 = vector.multi_reduction <add>, %207, %cst_60 [1] : vector<16x32xf32> to vector<16xf32>
    %209 = vector.shape_cast %208 : vector<16xf32> to vector<16x1xf32>
    %cst_61 = arith.constant 3.200000e+01 : f32
    %210 = vector.broadcast %cst_61 : f32 to vector<16x1xf32>
    %211 = arith.divf %209, %210 : vector<16x1xf32>
    %212 = vector.broadcast %204 : vector<16x1xf32> to vector<16x32xf32>
    %213 = arith.subf %200, %212 : vector<16x32xf32>
    %cst_62 = arith.constant 9.99999974E-6 : f32
    %214 = vector.broadcast %cst_62 : f32 to vector<16x1xf32>
    %215 = arith.addf %211, %214 : vector<16x1xf32>
    %216 = math.rsqrt %215 : vector<16x1xf32>
    %217 = vector.broadcast %216 : vector<16x1xf32> to vector<16x32xf32>
    %218 = arith.mulf %213, %217 : vector<16x32xf32>
    %219 = vector.broadcast %128 : vector<1x32xf32> to vector<16x32xf32>
    %220 = arith.mulf %218, %219 : vector<16x32xf32>
    %221 = vector.broadcast %129 : vector<1x32xf32> to vector<16x32xf32>
    %222 = arith.addf %220, %221 : vector<16x32xf32>
    %c320 = arith.constant 320 : index
    %c0_63 = arith.constant 0 : index
    %223 = vector.load %arg1[%c320, %c0_63] : memref<416x128xf32, #tpu.memory_space<vmem>>, vector<32x128xf32>
    %c48 = arith.constant 48 : index
    %c0_64 = arith.constant 0 : index
    %224 = vector.load %arg2[%c48, %c0_64] : memref<56x128xf32, #tpu.memory_space<vmem>>, vector<1x128xf32>
    %cst_65 = arith.constant dense<0.000000e+00> : vector<16x128xf32>
    %225 = tpu.matmul %222, %223, %cst_65 {dimension_numbers = #tpu.dot_dimension_numbers<[1], [0], [0], [1], [0, 0, 1, 1], [], []>} : vector<16x32xf32>, vector<32x128xf32>, vector<16x128xf32> -> vector<16x128xf32>
    %226 = vector.broadcast %224 : vector<1x128xf32> to vector<16x128xf32>
    %227 = arith.addf %225, %226 : vector<16x128xf32>
    %cst_66 = arith.constant dense<0xFF800000> : vector<16xf32>
    %228 = vector.multi_reduction <maximumf>, %227, %cst_66 [1] : vector<16x128xf32> to vector<16xf32>
    %229 = vector.shape_cast %228 : vector<16xf32> to vector<16x1xf32>
    %230 = vector.broadcast %229 : vector<16x1xf32> to vector<16x128xf32>
    %231 = arith.subf %227, %230 : vector<16x128xf32>
    %232 = math.exp %231 : vector<16x128xf32>
    %cst_67 = arith.constant dense<0.000000e+00> : vector<16xf32>
    %233 = vector.multi_reduction <add>, %232, %cst_67 [1] : vector<16x128xf32> to vector<16xf32>
    %234 = vector.shape_cast %233 : vector<16xf32> to vector<16x1xf32>
    %235 = math.log %234 : vector<16x1xf32>
    %236 = vector.broadcast %235 : vector<16x1xf32> to vector<16x128xf32>
    %237 = arith.subf %231, %236 : vector<16x128xf32>
    %c0_68 = arith.constant 0 : index
    %c0_69 = arith.constant 0 : index
    %238 = vector.load %arg3[%c0_68, %c0_69] : memref<16x128xf32, #tpu.memory_space<vmem>>, vector<16x128xf32>
    tpu.vector_store %arg3[%c0_68, %c0_69], %237 {strides = array<i32>} : memref<16x128xf32, #tpu.memory_space<vmem>>, vector<16x128xf32>,
    return
  }
}

</mosaic_0001>

<llo_original>
// kernel: transformer_forward.1
$region0: #{transformer_forward.1}
  #allocation0 [shape = 'u32[]', space=smem, size = 0x4, offset = 0x4, fixed_abs, tag = 'smem constant byte address 0x4 - core index']
  #allocation1 [shape = 'u32[72,128]{1,0:T(1,128)}', space=vmem, size = 0x9000, scoped, tag = 'internal scratch']
  %s0 = inlined_call_operand.vmem [shape: s32[16,1], index: 0, kind: input, shape index: {}]
  %s1 = inlined_call_operand.hbm [shape: f32[416,128], index: 1, kind: input, shape index: {}]
  %s2 = inlined_call_operand.hbm [shape: f32[56,128], index: 2, kind: input, shape index: {}]
  %s3 = inlined_call_operand.hbm [shape: f32[16,128], index: 3, kind: output, shape index: {}]
  %s4 = sld [smem:[#allocation0]]
  $region30: #{transformer_forward.1} parent=0
    _
  %s6 = ssub.s32 1, %s4
  %s7 = scalar_select 0, %s6, %s4
  $region1: #{transformer_forward.1} parent=0
    #allocation2 [shape = 'u8[212992]{0}', space=vmem, size = 0x34000, scoped, tag = 'input window, operand 1, single buffered']
    #allocation3 [shape = 's32[1]{0}', space=sflag, size = 0x4, scoped, tag = 'scoped memory for transformer_forward.1']
    #allocation4 [shape = 's32[1]{0}', space=sflag, size = 0x4, scoped, tag = 'scoped memory for transformer_forward.1']
    #allocation5 [shape = 'u8[28672]{0}', space=vmem, size = 0x7000, scoped, tag = 'input window, operand 2, single buffered']
    #allocation6 [shape = 's32[1]{0}', space=sflag, size = 0x4, scoped, tag = 'scoped memory for transformer_forward.1']
    #allocation7 [shape = 'u8[8192]{0}', space=vmem, size = 0x2000, scoped, tag = 'output window, operand 0, single buffered']
    %8 = vsyncpa [#allocation3], 0
    %9 = vsyncpa [#allocation6], 0
    %10 = vsyncpa [#allocation4], 0
    // Predicated region
    $region2: #{transformer_forward.1} parent=1 // pred_check
      _
    $region3: #{transformer_forward.1} parent=1 // pred_check_branch
      %12 = sbr.rel (0) target = $region5
    $region4: #{transformer_forward.1} parent=1 // pred_region
      _
    $region5: #{transformer_forward.1} parent=1 // pred_fallthru
      _
    // Predicated region
    $region6: #{transformer_forward.1} parent=1 // pred_check
      _
    $region7: #{transformer_forward.1} parent=1 // pred_check_branch
      %14 = sbr.rel (0) target = $region9
    $region8: #{transformer_forward.1} parent=1 // pred_region
      %16 = vsyncadd [#allocation3], 0
      %s17 = sshll.u32 %s1, 4
      %s18 = int_to_ptr.hbm [resolvable:$true] %s17
      %s19 = sshll.u32 [#allocation2], 4
      %s20 = int_to_ptr.vmem [resolvable:$true] %s19
      %25 = dma.hbm_to_vmem [thread:$0]  %s18, 6656, %s20, [#allocation3], 128, 128, 8
    $region9: #{transformer_forward.1} parent=1 // pred_fallthru
      _
    // Predicated region
    $region10: #{transformer_forward.1} parent=1 // pred_check
      _
    $region11: #{transformer_forward.1} parent=1 // pred_check_branch
      %27 = sbr.rel (0) target = $region13
    $region12: #{transformer_forward.1} parent=1 // pred_region
      %29 = vsyncadd [#allocation6], 0
      %s30 = sshll.u32 %s2, 4
      %s31 = int_to_ptr.hbm [resolvable:$true] %s30
      %s32 = sshll.u32 [#allocation5], 4
      %s33 = int_to_ptr.vmem [resolvable:$true] %s32
      %38 = dma.hbm_to_vmem [thread:$0]  %s31, 896, %s33, [#allocation6], 128, 128, 8
    $region13: #{transformer_forward.1} parent=1 // pred_fallthru
      _
    // Predicated region
    $region14: #{transformer_forward.1} parent=1 // pred_check
      _
    $region15: #{transformer_forward.1} parent=1 // pred_check_branch
      %40 = sbr.rel (0) target = $region17
    $region16: #{transformer_forward.1} parent=1 // pred_region
      %42 = dma.done [#allocation3], 6656
    $region17: #{transformer_forward.1} parent=1 // pred_fallthru
      _
    // Predicated region
    $region18: #{transformer_forward.1} parent=1 // pred_check
      _
    $region19: #{transformer_forward.1} parent=1 // pred_check_branch
      %44 = sbr.rel (0) target = $region21
    $region20: #{transformer_forward.1} parent=1 // pred_region
      %46 = dma.done [#allocation6], 896
    $region21: #{transformer_forward.1} parent=1 // pred_fallthru
      _
    %v47 = vld [vmem:[%s0] sm:$0xff]
    %v48 = vld [vmem:[%s0 + $0x8] sm:$0xff]
    %v49 = vlaneseq
    %v50 = vand.u32 %v49, 127
    %51 = vset.pattern.permute.xlu0 0
    %52 = vperm.xlu0 %51, %v47
    %v53 = vpop.permute.xlu0 %52
    %54 = vset.pattern.permute.xlu0 0
    %55 = vperm.xlu0 %54, %v48
    %v56 = vpop.permute.xlu0 %55
    %vm57 = vcmp.eq.s32.totalorder %v53, %v50
    %vm58 = vcmp.eq.s32.totalorder %v56, %v50
    %v59 = vsel %vm57, 1, 0
    %v60 = vsel %vm58, 1, 0
    %v61 = vcvt.s32.f32 %v59
    %v62 = vcvt.s32.f32 %v60
    %v63 = vld [vmem:[#allocation2 + $0x160] sm:$0xff]
    %v64 = vld [vmem:[#allocation2 + $0x168] sm:$0xff]
    %v65 = vld [vmem:[#allocation2 + $0x170] sm:$0xff]
    %v66 = vld [vmem:[#allocation2 + $0x178] sm:$0xff]
    %v67 = vld [vmem:[#allocation2 + $0x180] sm:$0xff]
    %v68 = vld [vmem:[#allocation2 + $0x188] sm:$0xff]
    %v69 = vld [vmem:[#allocation2 + $0x190] sm:$0xff]
    %v70 = vld [vmem:[#allocation2 + $0x198] sm:$0xff]
    %v71 = vld [vmem:[#allocation5] sm:$0xff]
    %v72 = vld [vmem:[#allocation5 + $0x8] sm:$0xff]
    %vm73 = vcmask 523264
    %v75 = vsel %vm73, %v61, 0
    %v78 = vsel %vm73, %v62, 0
    %80 = vmatpush.msra.mxu0 0.0
    %81 = vmatpush.msra.mxu0 0.0
    %82 = vmatpush.msra.mxu0 0.0
    %83 = vmatpush.msra.mxu0 0.0
    %84 = vmatpush.msra.mxu0 0.0
    %85 = vmatpush.msra.mxu0 0.0
    %86 = vmatpush.msra.mxu0 0.0
    %87 = vmatpush.msra.mxu0 0.0
    %88 = vmatpush.msra.mxu0 %v70
    %89 = vmatpush.msra.mxu0 %v69
    %90 = vmatpush.msra.mxu0 %v68
    %91 = vmatpush.msra.mxu0 %v67
    %92 = vmatpush.msra.mxu0 %v66
    %93 = vmatpush.msra.mxu0 %v65
    %94 = vmatpush.msra.mxu0 %v64
    %95 = vmatpush.msra.mxu0 %v63
    %96 = vmatmul.f32.gmra.mxu0 %v75
    %v97 = vpop.f32.mrf.mxu0
    %v98 = vadd.f32 %v71, %v97
    %99 = vmatmul.f32.gmra.mxu0 %v78
    %v100 = vpop.f32.mrf.mxu0
    %v101 = vadd.f32 %v72, %v100
    %102 = vdwg.mxu0
    %v103 = vld [vmem:[#allocation5 + $0x10] sm:$0xff]
    %v104 = vld [vmem:[#allocation5 + $0x18] sm:$0xff]
    %v105 = vld [vmem:[#allocation5 + $0x20] sm:$0xff]
    %v106 = vld [vmem:[#allocation2] sm:$0xff]
    %v107 = vld [vmem:[#allocation2 + $0x8] sm:$0xff]
    %v108 = vld [vmem:[#allocation2 + $0x10] sm:$0xff]
    %v109 = vld [vmem:[#allocation2 + $0x18] sm:$0xff]
    %v110 = vld [vmem:[#allocation2 + $0x20] sm:$0xff]
    %v111 = vld [vmem:[#allocation2 + $0x28] sm:$0xff]
    %v112 = vld [vmem:[#allocation2 + $0x30] sm:$0xff]
    %v113 = vld [vmem:[#allocation2 + $0x38] sm:$0xff]
    %v114 = vld [vmem:[#allocation2 + $0x40] sm:$0xff]
    %v115 = vld [vmem:[#allocation2 + $0x48] sm:$0xff]
    %v116 = vld [vmem:[#allocation2 + $0x50] sm:$0xff]
    %v117 = vld [vmem:[#allocation2 + $0x58] sm:$0xff]
    %v118 = vld [vmem:[#allocation2 + $0x60] sm:$0xff]
    %v119 = vld [vmem:[#allocation2 + $0x68] sm:$0xff]
    %v120 = vld [vmem:[#allocation2 + $0x70] sm:$0xff]
    %v121 = vld [vmem:[#allocation2 + $0x78] sm:$0xff]
    %v122 = vld [vmem:[#allocation2 + $0x80] sm:$0xff]
    %v123 = vld [vmem:[#allocation2 + $0x88] sm:$0xff]
    %v124 = vld [vmem:[#allocation2 + $0x90] sm:$0xff]
    %v125 = vld [vmem:[#allocation2 + $0x98] sm:$0xff]
    %v126 = vperm.slane %v105, 0
    %vm127 = vcmask 261120
    %v129 = vsel %vm127, %v98, 0
    %v132 = vsel %vm127, %v101, 0
    %134 = vmatpush.msra.mxu0 0.0
    %135 = vmatpush.msra.mxu0 0.0
    %136 = vmatpush.msra.mxu0 0.0
    %137 = vmatpush.msra.mxu0 0.0
    %138 = vmatpush.msra.mxu0 0.0
    %139 = vmatpush.msra.mxu0 0.0
    %140 = vmatpush.msra.mxu0 0.0
    %141 = vmatpush.msra.mxu0 0.0
    %142 = vmatpush.msra.mxu0 0.0
    %143 = vmatpush.msra.mxu0 0.0
    %144 = vmatpush.msra.mxu0 0.0
    %145 = vmatpush.msra.mxu0 0.0
    %146 = vmatpush.msra.mxu0 %v109
    %147 = vmatpush.msra.mxu0 %v108
    %148 = vmatpush.msra.mxu0 %v107
    %149 = vmatpush.msra.mxu0 %v106
    %150 = vmatmul.f32.gmra.mxu0 %v129
    %v151 = vpop.f32.mrf.mxu0
    %v152 = vadd.f32 %v126, %v151
    %153 = vmatmul.f32.gmra.mxu0 %v132
    %v154 = vpop.f32.mrf.mxu0
    %v155 = vadd.f32 %v126, %v154
    %156 = vdwg.mxu0
    %159 = vrot.lane.b32.xlu0 %v152, 96
    %v160 = vpop.permute.xlu0 %159
    %161 = vrot.lane.b32.xlu0 %v155, 96
    %v162 = vpop.permute.xlu0 %161
    %vm163 = vcmask 130048
    %v164 = vsel %vm163, %v152, 0
    %v166 = vsel %vm163, %v155, 0
    %v168 = vsel %vm163, %v160, 0
    %v170 = vsel %vm163, %v162, 0
    %172 = vmatpush.xpose.msra.mxu0 0.0
    %173 = vmatpush.xpose.msra.mxu0 0.0
    %174 = vmatpush.xpose.msra.mxu0 0.0
    %175 = vmatpush.xpose.msra.mxu0 0.0
    %176 = vmatpush.xpose.msra.mxu0 0.0
    %177 = vmatpush.xpose.msra.mxu0 0.0
    %178 = vmatpush.xpose.msra.mxu0 0.0
    %179 = vmatpush.xpose.msra.mxu0 0.0
    %180 = vmatpush.xpose.msra.mxu0 0.0
    %181 = vmatpush.xpose.msra.mxu0 0.0
    %182 = vmatpush.xpose.msra.mxu0 0.0
    %183 = vmatpush.xpose.msra.mxu0 0.0
    %184 = vmatpush.xpose.msra.mxu0 0.0
    %185 = vmatpush.xpose.msra.mxu0 0.0
    %186 = vmatpush.xpose.msra.mxu0 %v170
    %187 = vmatpush.xpose.msra.mxu0 %v168
    %188 = vmatmul.f32.gmra.mxu0 %v164
    %v189 = vpop.f32.mrf.mxu0
    %v190 = vadd.f32 %v103, %v189
    %191 = vmatmul.f32.gmra.mxu0 %v166
    %v192 = vpop.f32.mrf.mxu0
    %v193 = vadd.f32 %v104, %v192
    %194 = vdwg.mxu0
    %v195 = vsel %vm163, %v190, -inf
    %196 = vmax.xlane.f32.xlu0 %v195
    %v197 = vpop.xlane.xlu0 %196
    %v198 = vsel %vm163, %v193, -inf
    %199 = vmax.xlane.f32.xlu0 %v198
    %v200 = vpop.xlane.xlu0 %199
    %v201 = vsub.f32 %v190, %v197
    %v202 = vsub.f32 %v193, %v200
    %v203 = vmul.f32 %v201, 1.442695
    %v204 = vpow.pop %v203
    %v205 = vmul.f32 %v202, 1.442695
    %v206 = vpow.pop %v205
    %v207 = vsel %vm163, %v204, 0.0
    %208 = vadd.xlane.f32.xlu0 %v207
    %v209 = vpop.xlane.xlu0 %208
    %v210 = vsel %vm163, %v206, 0.0
    %211 = vadd.xlane.f32.xlu0 %v210
    %v212 = vpop.xlane.xlu0 %211
    %v213 = vrcp.pop %v209
    %v214 = vmul.f32 %v209, %v213
    %v215 = vsub.f32 1.0, %v214
    %v216 = vmul.f32 %v213, %v215
    %v217 = vadd.f32 %v213, %v216
    %vm218 = vweird.f32 %v209
    %vm219 = vweird.f32 %v213
    %vm220 = vmor %vm218, %vm219
    %v221 = vsel %vm220, %v213, %v217
    %v222 = vand.u32 2147483647, %v209
    %vm223 = vcmp.eq.f32.partialorder %v222, 8.507059e+37
    %v224 = vand.u32 %v209, 2147483648
    %v225 = vor.u32 1.1754944e-38, %v224
    %v226 = vsel %vm223, %v225, %v221
    %v227 = vmul.f32 %v204, %v226
    %v228 = vrcp.pop %v212
    %v229 = vmul.f32 %v212, %v228
    %v230 = vsub.f32 1.0, %v229
    %v231 = vmul.f32 %v228, %v230
    %v232 = vadd.f32 %v228, %v231
    %vm233 = vweird.f32 %v212
    %vm234 = vweird.f32 %v228
    %vm235 = vmor %vm233, %vm234
    %v236 = vsel %vm235, %v228, %v232
    %v237 = vand.u32 2147483647, %v212
    %vm238 = vcmp.eq.f32.partialorder %v237, 8.507059e+37
    %v239 = vand.u32 %v212, 2147483648
    %v240 = vor.u32 1.1754944e-38, %v239
    %v241 = vsel %vm238, %v240, %v236
    %v242 = vmul.f32 %v206, %v241
    %243 = vrot.lane.b32.xlu0 %v152, 64
    %v244 = vpop.permute.xlu0 %243
    %245 = vrot.lane.b32.xlu0 %v155, 64
    %v246 = vpop.permute.xlu0 %245
    %v250 = vsel %vm163, %v227, 0
    %v253 = vsel %vm163, %v242, 0
    %255 = vmatpush.msra.mxu0 0.0
    %256 = vmatpush.msra.mxu0 0.0
    %257 = vmatpush.msra.mxu0 0.0
    %258 = vmatpush.msra.mxu0 0.0
    %259 = vmatpush.msra.mxu0 0.0
    %260 = vmatpush.msra.mxu0 0.0
    %261 = vmatpush.msra.mxu0 0.0
    %262 = vmatpush.msra.mxu0 0.0
    %263 = vmatpush.msra.mxu0 0.0
    %264 = vmatpush.msra.mxu0 0.0
    %265 = vmatpush.msra.mxu0 0.0
    %266 = vmatpush.msra.mxu0 0.0
    %267 = vmatpush.msra.mxu0 0.0
    %268 = vmatpush.msra.mxu0 0.0
    %269 = vmatpush.msra.mxu0 %v246
    %270 = vmatpush.msra.mxu0 %v244
    %271 = vmatmul.f32.gmra.mxu0 %v250
    %v272 = vpop.f32.mrf.mxu0
    %v273 = vadd.f32 0.0, %v272
    %274 = vmatmul.f32.gmra.mxu0 %v253
    %v275 = vpop.f32.mrf.mxu0
    %v276 = vadd.f32 0.0, %v275
    %277 = vdwg.mxu0
    %278 = vrot.lane.b32.xlu0 %v152, 112
    %v279 = vpop.permute.xlu0 %278
    %280 = vrot.lane.b32.xlu0 %v155, 112
    %v281 = vpop.permute.xlu0 %280
    %282 = vrot.lane.b32.xlu0 %v152, 80
    %v283 = vpop.permute.xlu0 %282
    %284 = vrot.lane.b32.xlu0 %v155, 80
    %v285 = vpop.permute.xlu0 %284
    %v286 = vsel %vm163, %v279, 0
    %v288 = vsel %vm163, %v281, 0
    %v290 = vsel %vm163, %v283, 0
    %v292 = vsel %vm163, %v285, 0
    %294 = vmatpush.xpose.msra.mxu0 0.0
    %295 = vmatpush.xpose.msra.mxu0 0.0
    %296 = vmatpush.xpose.msra.mxu0 0.0
    %297 = vmatpush.xpose.msra.mxu0 0.0
    %298 = vmatpush.xpose.msra.mxu0 0.0
    %299 = vmatpush.xpose.msra.mxu0 0.0
    %300 = vmatpush.xpose.msra.mxu0 0.0
    %301 = vmatpush.xpose.msra.mxu0 0.0
    %302 = vmatpush.xpose.msra.mxu0 0.0
    %303 = vmatpush.xpose.msra.mxu0 0.0
    %304 = vmatpush.xpose.msra.mxu0 0.0
    %305 = vmatpush.xpose.msra.mxu0 0.0
    %306 = vmatpush.xpose.msra.mxu0 0.0
    %307 = vmatpush.xpose.msra.mxu0 0.0
    %308 = vmatpush.xpose.msra.mxu0 %v292
    %309 = vmatpush.xpose.msra.mxu0 %v290
    %310 = vmatmul.f32.gmra.mxu0 %v286
    %v311 = vpop.f32.mrf.mxu0
    %v312 = vadd.f32 %v103, %v311
    %313 = vmatmul.f32.gmra.mxu0 %v288
    %v314 = vpop.f32.mrf.mxu0
    %v315 = vadd.f32 %v104, %v314
    %316 = vdwg.mxu0
    %v317 = vsel %vm163, %v312, -inf
    %318 = vmax.xlane.f32.xlu0 %v317
    %v319 = vpop.xlane.xlu0 %318
    %v320 = vsel %vm163, %v315, -inf
    %321 = vmax.xlane.f32.xlu0 %v320
    %v322 = vpop.xlane.xlu0 %321
    %v323 = vsub.f32 %v312, %v319
    %v324 = vsub.f32 %v315, %v322
    %v325 = vmul.f32 %v323, 1.442695
    %v326 = vpow.pop %v325
    %v327 = vmul.f32 %v324, 1.442695
    %v328 = vpow.pop %v327
    %v329 = vsel %vm163, %v326, 0.0
    %330 = vadd.xlane.f32.xlu0 %v329
    %v331 = vpop.xlane.xlu0 %330
    %v332 = vsel %vm163, %v328, 0.0
    %333 = vadd.xlane.f32.xlu0 %v332
    %v334 = vpop.xlane.xlu0 %333
    %v335 = vrcp.pop %v331
    %v336 = vmul.f32 %v331, %v335
    %v337 = vsub.f32 1.0, %v336
    %v338 = vmul.f32 %v335, %v337
    %v339 = vadd.f32 %v335, %v338
    %vm340 = vweird.f32 %v331
    %vm341 = vweird.f32 %v335
    %vm342 = vmor %vm340, %vm341
    %v343 = vsel %vm342, %v335, %v339
    %v344 = vand.u32 2147483647, %v331
    %vm345 = vcmp.eq.f32.partialorder %v344, 8.507059e+37
    %v346 = vand.u32 %v331, 2147483648
    %v347 = vor.u32 1.1754944e-38, %v346
    %v348 = vsel %vm345, %v347, %v343
    %v349 = vmul.f32 %v326, %v348
    %v350 = vrcp.pop %v334
    %v351 = vmul.f32 %v334, %v350
    %v352 = vsub.f32 1.0, %v351
    %v353 = vmul.f32 %v350, %v352
    %v354 = vadd.f32 %v350, %v353
    %vm355 = vweird.f32 %v334
    %vm356 = vweird.f32 %v350
    %vm357 = vmor %vm355, %vm356
    %v358 = vsel %vm357, %v350, %v354
    %v359 = vand.u32 2147483647, %v334
    %vm360 = vcmp.eq.f32.partialorder %v359, 8.507059e+37
    %v361 = vand.u32 %v334, 2147483648
    %v362 = vor.u32 1.1754944e-38, %v361
    %v363 = vsel %vm360, %v362, %v358
    %v364 = vmul.f32 %v328, %v363
    %365 = vrot.lane.b32.xlu0 %v152, 48
    %v366 = vpop.permute.xlu0 %365
    %367 = vrot.lane.b32.xlu0 %v155, 48
    %v368 = vpop.permute.xlu0 %367
    %v372 = vsel %vm163, %v349, 0
    %v375 = vsel %vm163, %v364, 0
    %377 = vmatpush.msra.mxu0 0.0
    %378 = vmatpush.msra.mxu0 0.0
    %379 = vmatpush.msra.mxu0 0.0
    %380 = vmatpush.msra.mxu0 0.0
    %381 = vmatpush.msra.mxu0 0.0
    %382 = vmatpush.msra.mxu0 0.0
    %383 = vmatpush.msra.mxu0 0.0
    %384 = vmatpush.msra.mxu0 0.0
    %385 = vmatpush.msra.mxu0 0.0
    %386 = vmatpush.msra.mxu0 0.0
    %387 = vmatpush.msra.mxu0 0.0
    %388 = vmatpush.msra.mxu0 0.0
    %389 = vmatpush.msra.mxu0 0.0
    %390 = vmatpush.msra.mxu0 0.0
    %391 = vmatpush.msra.mxu0 %v368
    %392 = vmatpush.msra.mxu0 %v366
    %393 = vmatmul.f32.gmra.mxu0 %v372
    %v394 = vpop.f32.mrf.mxu0
    %v395 = vadd.f32 0.0, %v394
    %396 = vmatmul.f32.gmra.mxu0 %v375
    %v397 = vpop.f32.mrf.mxu0
    %v398 = vadd.f32 0.0, %v397
    %399 = vdwg.mxu0
    %402 = vrot.lane.b32.xlu0 %v395, 16
    %v403 = vpop.permute.xlu0 %402
    %404 = vrot.lane.b32.xlu0 %v398, 16
    %v405 = vpop.permute.xlu0 %404
    %v408 = vsel %vm163, %v273, %v403
    %v409 = vsel %vm163, %v276, %v405
    %v410 = vperm.slane %v105, 1
    %v412 = vsel %vm127, %v408, 0
    %v415 = vsel %vm127, %v409, 0
    %417 = vmatpush.msra.mxu0 0.0
    %418 = vmatpush.msra.mxu0 0.0
    %419 = vmatpush.msra.mxu0 0.0
    %420 = vmatpush.msra.mxu0 0.0
    %421 = vmatpush.msra.mxu0 0.0
    %422 = vmatpush.msra.mxu0 0.0
    %423 = vmatpush.msra.mxu0 0.0
    %424 = vmatpush.msra.mxu0 0.0
    %425 = vmatpush.msra.mxu0 0.0
    %426 = vmatpush.msra.mxu0 0.0
    %427 = vmatpush.msra.mxu0 0.0
    %428 = vmatpush.msra.mxu0 0.0
    %429 = vmatpush.msra.mxu0 %v113
    %430 = vmatpush.msra.mxu0 %v112
    %431 = vmatpush.msra.mxu0 %v111
    %432 = vmatpush.msra.mxu0 %v110
    %433 = vmatmul.f32.gmra.mxu0 %v412
    %v434 = vpop.f32.mrf.mxu0
    %v435 = vadd.f32 %v410, %v434
    %436 = vmatmul.f32.gmra.mxu0 %v415
    %v437 = vpop.f32.mrf.mxu0
    %v438 = vadd.f32 %v410, %v437
    %439 = vdwg.mxu0
    %v440 = vadd.f32 %v98, %v435
    %v441 = vadd.f32 %v101, %v438
    %v442 = vsel %vm127, %v440, 0.0
    %443 = vadd.xlane.f32.xlu0 %v442
    %v444 = vpop.xlane.xlu0 %443
    %v445 = vsel %vm127, %v441, 0.0
    %446 = vadd.xlane.f32.xlu0 %v445
    %v447 = vpop.xlane.xlu0 %446
    %v448 = vrcp.pop 32.0
    %v449 = vmul.f32 32.0, %v448
    %v450 = vsub.f32 1.0, %v449
    %v451 = vmul.f32 %v448, %v450
    %v452 = vadd.f32 %v448, %v451
    %vm453 = vweird.f32 %v448
    %v454 = vsel %vm453, %v448, %v452
    %v455 = vmul.f32 %v444, %v454
    %v456 = vmul.f32 %v447, %v454
    %v457 = vsub.f32 %v440, %v455
    %v458 = vsub.f32 %v441, %v456
    %v459 = vmul.f32 %v457, %v457
    %v460 = vmul.f32 %v458, %v458
    %v461 = vsel %vm127, %v459, 0.0
    %462 = vadd.xlane.f32.xlu0 %v461
    %v463 = vpop.xlane.xlu0 %462
    %v464 = vsel %vm127, %v460, 0.0
    %465 = vadd.xlane.f32.xlu0 %v464
    %v466 = vpop.xlane.xlu0 %465
    %v467 = vmul.f32 %v463, %v454
    %v468 = vmul.f32 %v466, %v454
    %v469 = vadd.f32 %v467, 1e-05
    %v470 = vadd.f32 %v468, 1e-05
    %v471 = vrsqrt.pop %v469
    %v472 = vmul.f32 %v471, %v469
    %v473 = vmul.f32 %v472, %v471
    %v474 = vmul.f32 0.5, %v473
    %v475 = vsub.f32 1.5, %v474
    %v476 = vmul.f32 %v471, %v475
    %vm477 = vweird.f32 %v469
    %vm478 = vweird.f32 %v471
    %vm479 = vmor %vm477, %vm478
    %v480 = vsel %vm479, %v471, %v476
    %v481 = vrsqrt.pop %v470
    %v482 = vmul.f32 %v481, %v470
    %v483 = vmul.f32 %v482, %v481
    %v484 = vmul.f32 0.5, %v483
    %v485 = vsub.f32 1.5, %v484
    %v486 = vmul.f32 %v481, %v485
    %vm487 = vweird.f32 %v470
    %vm488 = vweird.f32 %v481
    %vm489 = vmor %vm487, %vm488
    %v490 = vsel %vm489, %v481, %v486
    %v491 = vmul.f32 %v457, %v480
    %v492 = vmul.f32 %v458, %v490
    %v493 = vperm.slane %v105, 2
    %v494 = vmul.f32 %v491, %v493
    %v495 = vmul.f32 %v492, %v493
    %v496 = vperm.slane %v105, 3
    %v497 = vadd.f32 %v494, %v496
    %v498 = vadd.f32 %v495, %v496
    %v499 = vperm.slane %v105, 4
    %v501 = vsel %vm127, %v497, 0
    %v504 = vsel %vm127, %v498, 0
    %506 = vmatpush.msra.mxu0 0.0
    %507 = vmatpush.msra.mxu0 0.0
    %508 = vmatpush.msra.mxu0 0.0
    %509 = vmatpush.msra.mxu0 0.0
    %510 = vmatpush.msra.mxu0 0.0
    %511 = vmatpush.msra.mxu0 0.0
    %512 = vmatpush.msra.mxu0 0.0
    %513 = vmatpush.msra.mxu0 0.0
    %514 = vmatpush.msra.mxu0 0.0
    %515 = vmatpush.msra.mxu0 0.0
    %516 = vmatpush.msra.mxu0 0.0
    %517 = vmatpush.msra.mxu0 0.0
    %518 = vmatpush.msra.mxu0 %v117
    %519 = vmatpush.msra.mxu0 %v116
    %520 = vmatpush.msra.mxu0 %v115
    %521 = vmatpush.msra.mxu0 %v114
    %522 = vmatmul.f32.gmra.mxu0 %v501
    %v523 = vpop.f32.mrf.mxu0
    %v524 = vadd.f32 %v499, %v523
    %525 = vmatmul.f32.gmra.mxu0 %v504
    %v526 = vpop.f32.mrf.mxu0
    %v527 = vadd.f32 %v499, %v526
    %528 = vdwg.mxu0
    %v529 = vmax.f32 %v524, 0.0
    %v530 = vmax.f32 %v527, 0.0
    %v531 = vperm.slane %v105, 5
    %v533 = vsel %vm73, %v529, 0
    %v536 = vsel %vm73, %v530, 0
    %538 = vmatpush.msra.mxu0 0.0
    %539 = vmatpush.msra.mxu0 0.0
    %540 = vmatpush.msra.mxu0 0.0
    %541 = vmatpush.msra.mxu0 0.0
    %542 = vmatpush.msra.mxu0 0.0
    %543 = vmatpush.msra.mxu0 0.0
    %544 = vmatpush.msra.mxu0 0.0
    %545 = vmatpush.msra.mxu0 0.0
    %546 = vmatpush.msra.mxu0 %v125
    %547 = vmatpush.msra.mxu0 %v124
    %548 = vmatpush.msra.mxu0 %v123
    %549 = vmatpush.msra.mxu0 %v122
    %550 = vmatpush.msra.mxu0 %v121
    %551 = vmatpush.msra.mxu0 %v120
    %552 = vmatpush.msra.mxu0 %v119
    %553 = vmatpush.msra.mxu0 %v118
    %554 = vmatmul.f32.gmra.mxu0 %v533
    %v555 = vpop.f32.mrf.mxu0
    %v556 = vadd.f32 %v531, %v555
    %557 = vmatmul.f32.gmra.mxu0 %v536
    %v558 = vpop.f32.mrf.mxu0
    %v559 = vadd.f32 %v531, %v558
    %560 = vdwg.mxu0
    %v561 = vadd.f32 %v497, %v556
    %v562 = vadd.f32 %v498, %v559
    %v563 = vsel %vm127, %v561, 0.0
    %564 = vadd.xlane.f32.xlu0 %v563
    %v565 = vpop.xlane.xlu0 %564
    %v566 = vsel %vm127, %v562, 0.0
    %567 = vadd.xlane.f32.xlu0 %v566
    %v568 = vpop.xlane.xlu0 %567
    %v569 = vmul.f32 %v565, %v454
    %v570 = vmul.f32 %v568, %v454
    %v571 = vsub.f32 %v561, %v569
    %v572 = vsub.f32 %v562, %v570
    %v573 = vmul.f32 %v571, %v571
    %v574 = vmul.f32 %v572, %v572
    %v575 = vsel %vm127, %v573, 0.0
    %576 = vadd.xlane.f32.xlu0 %v575
    %v577 = vpop.xlane.xlu0 %576
    %v578 = vsel %vm127, %v574, 0.0
    %579 = vadd.xlane.f32.xlu0 %v578
    %v580 = vpop.xlane.xlu0 %579
    %v581 = vmul.f32 %v577, %v454
    %v582 = vmul.f32 %v580, %v454
    %v583 = vadd.f32 %v581, 1e-05
    %v584 = vadd.f32 %v582, 1e-05
    %v585 = vrsqrt.pop %v583
    %v586 = vmul.f32 %v585, %v583
    %v587 = vmul.f32 %v586, %v585
    %v588 = vmul.f32 0.5, %v587
    %v589 = vsub.f32 1.5, %v588
    %v590 = vmul.f32 %v585, %v589
    %vm591 = vweird.f32 %v583
    %vm592 = vweird.f32 %v585
    %vm593 = vmor %vm591, %vm592
    %v594 = vsel %vm593, %v585, %v590
    %v595 = vrsqrt.pop %v584
    %v596 = vmul.f32 %v595, %v584
    %v597 = vmul.f32 %v596, %v595
    %v598 = vmul.f32 0.5, %v597
    %v599 = vsub.f32 1.5, %v598
    %v600 = vmul.f32 %v595, %v599
    %vm601 = vweird.f32 %v584
    %vm602 = vweird.f32 %v595
    %vm603 = vmor %vm601, %vm602
    %v604 = vsel %vm603, %v595, %v600
    %v605 = vmul.f32 %v571, %v594
    %v606 = vmul.f32 %v572, %v604
    %v607 = vperm.slane %v105, 6
    %v608 = vmul.f32 %v605, %v607
    %v609 = vmul.f32 %v606, %v607
    %v610 = vperm.slane %v105, 7
    %v611 = vadd.f32 %v608, %v610
    %v612 = vadd.f32 %v609, %v610
    %v613 = vld [vmem:[#allocation5 + $0x28] sm:$0xff]
    %v614 = vld [vmem:[#allocation2 + $0xa0] sm:$0xff]
    %v615 = vld [vmem:[#allocation2 + $0xa8] sm:$0xff]
    %v616 = vld [vmem:[#allocation2 + $0xb0] sm:$0xff]
    %v617 = vld [vmem:[#allocation2 + $0xb8] sm:$0xff]
    %v618 = vld [vmem:[#allocation2 + $0xc0] sm:$0xff]
    %v619 = vld [vmem:[#allocation2 + $0xc8] sm:$0xff]
    %v620 = vld [vmem:[#allocation2 + $0xd0] sm:$0xff]
    %v621 = vld [vmem:[#allocation2 + $0xd8] sm:$0xff]
    %v622 = vld [vmem:[#allocation2 + $0xe0] sm:$0xff]
    %v623 = vld [vmem:[#allocation2 + $0xe8] sm:$0xff]
    %v624 = vld [vmem:[#allocation2 + $0xf0] sm:$0xff]
    %v625 = vld [vmem:[#allocation2 + $0xf8] sm:$0xff]
    %v626 = vld [vmem:[#allocation2 + $0x100] sm:$0xff]
    %v627 = vld [vmem:[#allocation2 + $0x108] sm:$0xff]
    %v628 = vld [vmem:[#allocation2 + $0x110] sm:$0xff]
    %v629 = vld [vmem:[#allocation2 + $0x118] sm:$0xff]
    %v630 = vld [vmem:[#allocation2 + $0x120] sm:$0xff]
    %v631 = vld [vmem:[#allocation2 + $0x128] sm:$0xff]
    %v632 = vld [vmem:[#allocation2 + $0x130] sm:$0xff]
    %v633 = vld [vmem:[#allocation2 + $0x138] sm:$0xff]
    %v634 = vperm.slane %v613, 0
    %v636 = vsel %vm127, %v611, 0
    %v639 = vsel %vm127, %v612, 0
    %641 = vmatpush.msra.mxu0 0.0
    %642 = vmatpush.msra.mxu0 0.0
    %643 = vmatpush.msra.mxu0 0.0
    %644 = vmatpush.msra.mxu0 0.0
    %645 = vmatpush.msra.mxu0 0.0
    %646 = vmatpush.msra.mxu0 0.0
    %647 = vmatpush.msra.mxu0 0.0
    %648 = vmatpush.msra.mxu0 0.0
    %649 = vmatpush.msra.mxu0 0.0
    %650 = vmatpush.msra.mxu0 0.0
    %651 = vmatpush.msra.mxu0 0.0
    %652 = vmatpush.msra.mxu0 0.0
    %653 = vmatpush.msra.mxu0 %v617
    %654 = vmatpush.msra.mxu0 %v616
    %655 = vmatpush.msra.mxu0 %v615
    %656 = vmatpush.msra.mxu0 %v614
    %657 = vmatmul.f32.gmra.mxu0 %v636
    %v658 = vpop.f32.mrf.mxu0
    %v659 = vadd.f32 %v634, %v658
    %660 = vmatmul.f32.gmra.mxu0 %v639
    %v661 = vpop.f32.mrf.mxu0
    %v662 = vadd.f32 %v634, %v661
    %663 = vdwg.mxu0
    %666 = vrot.lane.b32.xlu0 %v659, 96
    %v667 = vpop.permute.xlu0 %666
    %668 = vrot.lane.b32.xlu0 %v662, 96
    %v669 = vpop.permute.xlu0 %668
    %v670 = vsel %vm163, %v659, 0
    %v672 = vsel %vm163, %v662, 0
    %v674 = vsel %vm163, %v667, 0
    %v676 = vsel %vm163, %v669, 0
    %678 = vmatpush.xpose.msra.mxu0 0.0
    %679 = vmatpush.xpose.msra.mxu0 0.0
    %680 = vmatpush.xpose.msra.mxu0 0.0
    %681 = vmatpush.xpose.msra.mxu0 0.0
    %682 = vmatpush.xpose.msra.mxu0 0.0
    %683 = vmatpush.xpose.msra.mxu0 0.0
    %684 = vmatpush.xpose.msra.mxu0 0.0
    %685 = vmatpush.xpose.msra.mxu0 0.0
    %686 = vmatpush.xpose.msra.mxu0 0.0
    %687 = vmatpush.xpose.msra.mxu0 0.0
    %688 = vmatpush.xpose.msra.mxu0 0.0
    %689 = vmatpush.xpose.msra.mxu0 0.0
    %690 = vmatpush.xpose.msra.mxu0 0.0
    %691 = vmatpush.xpose.msra.mxu0 0.0
    %692 = vmatpush.xpose.msra.mxu0 %v676
    %693 = vmatpush.xpose.msra.mxu0 %v674
    %694 = vmatmul.f32.gmra.mxu0 %v670
    %v695 = vpop.f32.mrf.mxu0
    %v696 = vadd.f32 %v103, %v695
    %697 = vmatmul.f32.gmra.mxu0 %v672
    %v698 = vpop.f32.mrf.mxu0
    %v699 = vadd.f32 %v104, %v698
    %700 = vdwg.mxu0
    %v701 = vsel %vm163, %v696, -inf
    %702 = vmax.xlane.f32.xlu0 %v701
    %v703 = vpop.xlane.xlu0 %702
    %v704 = vsel %vm163, %v699, -inf
    %705 = vmax.xlane.f32.xlu0 %v704
    %v706 = vpop.xlane.xlu0 %705
    %v707 = vsub.f32 %v696, %v703
    %v708 = vsub.f32 %v699, %v706
    %v709 = vmul.f32 %v707, 1.442695
    %v710 = vpow.pop %v709
    %v711 = vmul.f32 %v708, 1.442695
    %v712 = vpow.pop %v711
    %v713 = vsel %vm163, %v710, 0.0
    %714 = vadd.xlane.f32.xlu0 %v713
    %v715 = vpop.xlane.xlu0 %714
    %v716 = vsel %vm163, %v712, 0.0
    %717 = vadd.xlane.f32.xlu0 %v716
    %v718 = vpop.xlane.xlu0 %717
    %v719 = vrcp.pop %v715
    %v720 = vmul.f32 %v715, %v719
    %v721 = vsub.f32 1.0, %v720
    %v722 = vmul.f32 %v719, %v721
    %v723 = vadd.f32 %v719, %v722
    %vm724 = vweird.f32 %v715
    %vm725 = vweird.f32 %v719
    %vm726 = vmor %vm724, %vm725
    %v727 = vsel %vm726, %v719, %v723
    %v728 = vand.u32 2147483647, %v715
    %vm729 = vcmp.eq.f32.partialorder %v728, 8.507059e+37
    %v730 = vand.u32 %v715, 2147483648
    %v731 = vor.u32 1.1754944e-38, %v730
    %v732 = vsel %vm729, %v731, %v727
    %v733 = vmul.f32 %v710, %v732
    %v734 = vrcp.pop %v718
    %v735 = vmul.f32 %v718, %v734
    %v736 = vsub.f32 1.0, %v735
    %v737 = vmul.f32 %v734, %v736
    %v738 = vadd.f32 %v734, %v737
    %vm739 = vweird.f32 %v718
    %vm740 = vweird.f32 %v734
    %vm741 = vmor %vm739, %vm740
    %v742 = vsel %vm741, %v734, %v738
    %v743 = vand.u32 2147483647, %v718
    %vm744 = vcmp.eq.f32.partialorder %v743, 8.507059e+37
    %v745 = vand.u32 %v718, 2147483648
    %v746 = vor.u32 1.1754944e-38, %v745
    %v747 = vsel %vm744, %v746, %v742
    %v748 = vmul.f32 %v712, %v747
    %749 = vrot.lane.b32.xlu0 %v659, 64
    %v750 = vpop.permute.xlu0 %749
    %751 = vrot.lane.b32.xlu0 %v662, 64
    %v752 = vpop.permute.xlu0 %751
    %v756 = vsel %vm163, %v733, 0
    %v759 = vsel %vm163, %v748, 0
    %761 = vmatpush.msra.mxu0 0.0
    %762 = vmatpush.msra.mxu0 0.0
    %763 = vmatpush.msra.mxu0 0.0
    %764 = vmatpush.msra.mxu0 0.0
    %765 = vmatpush.msra.mxu0 0.0
    %766 = vmatpush.msra.mxu0 0.0
    %767 = vmatpush.msra.mxu0 0.0
    %768 = vmatpush.msra.mxu0 0.0
    %769 = vmatpush.msra.mxu0 0.0
    %770 = vmatpush.msra.mxu0 0.0
    %771 = vmatpush.msra.mxu0 0.0
    %772 = vmatpush.msra.mxu0 0.0
    %773 = vmatpush.msra.mxu0 0.0
    %774 = vmatpush.msra.mxu0 0.0
    %775 = vmatpush.msra.mxu0 %v752
    %776 = vmatpush.msra.mxu0 %v750
    %777 = vmatmul.f32.gmra.mxu0 %v756
    %v778 = vpop.f32.mrf.mxu0
    %v779 = vadd.f32 0.0, %v778
    %780 = vmatmul.f32.gmra.mxu0 %v759
    %v781 = vpop.f32.mrf.mxu0
    %v782 = vadd.f32 0.0, %v781
    %783 = vdwg.mxu0
    %784 = vrot.lane.b32.xlu0 %v659, 112
    %v785 = vpop.permute.xlu0 %784
    %786 = vrot.lane.b32.xlu0 %v662, 112
    %v787 = vpop.permute.xlu0 %786
    %788 = vrot.lane.b32.xlu0 %v659, 80
    %v789 = vpop.permute.xlu0 %788
    %790 = vrot.lane.b32.xlu0 %v662, 80
    %v791 = vpop.permute.xlu0 %790
    %v792 = vsel %vm163, %v785, 0
    %v794 = vsel %vm163, %v787, 0
    %v796 = vsel %vm163, %v789, 0
    %v798 = vsel %vm163, %v791, 0
    %800 = vmatpush.xpose.msra.mxu0 0.0
    %801 = vmatpush.xpose.msra.mxu0 0.0
    %802 = vmatpush.xpose.msra.mxu0 0.0
    %803 = vmatpush.xpose.msra.mxu0 0.0
    %804 = vmatpush.xpose.msra.mxu0 0.0
    %805 = vmatpush.xpose.msra.mxu0 0.0
    %806 = vmatpush.xpose.msra.mxu0 0.0
    %807 = vmatpush.xpose.msra.mxu0 0.0
    %808 = vmatpush.xpose.msra.mxu0 0.0
    %809 = vmatpush.xpose.msra.mxu0 0.0
    %810 = vmatpush.xpose.msra.mxu0 0.0
    %811 = vmatpush.xpose.msra.mxu0 0.0
    %812 = vmatpush.xpose.msra.mxu0 0.0
    %813 = vmatpush.xpose.msra.mxu0 0.0
    %814 = vmatpush.xpose.msra.mxu0 %v798
    %815 = vmatpush.xpose.msra.mxu0 %v796
    %816 = vmatmul.f32.gmra.mxu0 %v792
    %v817 = vpop.f32.mrf.mxu0
    %v818 = vadd.f32 %v103, %v817
    %819 = vmatmul.f32.gmra.mxu0 %v794
    %v820 = vpop.f32.mrf.mxu0
    %v821 = vadd.f32 %v104, %v820
    %822 = vdwg.mxu0
    %v823 = vsel %vm163, %v818, -inf
    %824 = vmax.xlane.f32.xlu0 %v823
    %v825 = vpop.xlane.xlu0 %824
    %v826 = vsel %vm163, %v821, -inf
    %827 = vmax.xlane.f32.xlu0 %v826
    %v828 = vpop.xlane.xlu0 %827
    %v829 = vsub.f32 %v818, %v825
    %v830 = vsub.f32 %v821, %v828
    %v831 = vmul.f32 %v829, 1.442695
    %v832 = vpow.pop %v831
    %v833 = vmul.f32 %v830, 1.442695
    %v834 = vpow.pop %v833
    %v835 = vsel %vm163, %v832, 0.0
    %836 = vadd.xlane.f32.xlu0 %v835
    %v837 = vpop.xlane.xlu0 %836
    %v838 = vsel %vm163, %v834, 0.0
    %839 = vadd.xlane.f32.xlu0 %v838
    %v840 = vpop.xlane.xlu0 %839
    %v841 = vrcp.pop %v837
    %v842 = vmul.f32 %v837, %v841
    %v843 = vsub.f32 1.0, %v842
    %v844 = vmul.f32 %v841, %v843
    %v845 = vadd.f32 %v841, %v844
    %vm846 = vweird.f32 %v837
    %vm847 = vweird.f32 %v841
    %vm848 = vmor %vm846, %vm847
    %v849 = vsel %vm848, %v841, %v845
    %v850 = vand.u32 2147483647, %v837
    %vm851 = vcmp.eq.f32.partialorder %v850, 8.507059e+37
    %v852 = vand.u32 %v837, 2147483648
    %v853 = vor.u32 1.1754944e-38, %v852
    %v854 = vsel %vm851, %v853, %v849
    %v855 = vmul.f32 %v832, %v854
    %v856 = vrcp.pop %v840
    %v857 = vmul.f32 %v840, %v856
    %v858 = vsub.f32 1.0, %v857
    %v859 = vmul.f32 %v856, %v858
    %v860 = vadd.f32 %v856, %v859
    %vm861 = vweird.f32 %v840
    %vm862 = vweird.f32 %v856
    %vm863 = vmor %vm861, %vm862
    %v864 = vsel %vm863, %v856, %v860
    %v865 = vand.u32 2147483647, %v840
    %vm866 = vcmp.eq.f32.partialorder %v865, 8.507059e+37
    %v867 = vand.u32 %v840, 2147483648
    %v868 = vor.u32 1.1754944e-38, %v867
    %v869 = vsel %vm866, %v868, %v864
    %v870 = vmul.f32 %v834, %v869
    %871 = vrot.lane.b32.xlu0 %v659, 48
    %v872 = vpop.permute.xlu0 %871
    %873 = vrot.lane.b32.xlu0 %v662, 48
    %v874 = vpop.permute.xlu0 %873
    %v878 = vsel %vm163, %v855, 0
    %v881 = vsel %vm163, %v870, 0
    %883 = vmatpush.msra.mxu0 0.0
    %884 = vmatpush.msra.mxu0 0.0
    %885 = vmatpush.msra.mxu0 0.0
    %886 = vmatpush.msra.mxu0 0.0
    %887 = vmatpush.msra.mxu0 0.0
    %888 = vmatpush.msra.mxu0 0.0
    %889 = vmatpush.msra.mxu0 0.0
    %890 = vmatpush.msra.mxu0 0.0
    %891 = vmatpush.msra.mxu0 0.0
    %892 = vmatpush.msra.mxu0 0.0
    %893 = vmatpush.msra.mxu0 0.0
    %894 = vmatpush.msra.mxu0 0.0
    %895 = vmatpush.msra.mxu0 0.0
    %896 = vmatpush.msra.mxu0 0.0
    %897 = vmatpush.msra.mxu0 %v874
    %898 = vmatpush.msra.mxu0 %v872
    %899 = vmatmul.f32.gmra.mxu0 %v878
    %v900 = vpop.f32.mrf.mxu0
    %v901 = vadd.f32 0.0, %v900
    %902 = vmatmul.f32.gmra.mxu0 %v881
    %v903 = vpop.f32.mrf.mxu0
    %v904 = vadd.f32 0.0, %v903
    %905 = vdwg.mxu0
    %908 = vrot.lane.b32.xlu0 %v901, 16
    %v909 = vpop.permute.xlu0 %908
    %910 = vrot.lane.b32.xlu0 %v904, 16
    %v911 = vpop.permute.xlu0 %910
    %v914 = vsel %vm163, %v779, %v909
    %v915 = vsel %vm163, %v782, %v911
    %v916 = vperm.slane %v613, 1
    %v918 = vsel %vm127, %v914, 0
    %v921 = vsel %vm127, %v915, 0
    %923 = vmatpush.msra.mxu0 0.0
    %924 = vmatpush.msra.mxu0 0.0
    %925 = vmatpush.msra.mxu0 0.0
    %926 = vmatpush.msra.mxu0 0.0
    %927 = vmatpush.msra.mxu0 0.0
    %928 = vmatpush.msra.mxu0 0.0
    %929 = vmatpush.msra.mxu0 0.0
    %930 = vmatpush.msra.mxu0 0.0
    %931 = vmatpush.msra.mxu0 0.0
    %932 = vmatpush.msra.mxu0 0.0
    %933 = vmatpush.msra.mxu0 0.0
    %934 = vmatpush.msra.mxu0 0.0
    %935 = vmatpush.msra.mxu0 %v621
    %936 = vmatpush.msra.mxu0 %v620
    %937 = vmatpush.msra.mxu0 %v619
    %938 = vmatpush.msra.mxu0 %v618
    %939 = vmatmul.f32.gmra.mxu0 %v918
    %v940 = vpop.f32.mrf.mxu0
    %v941 = vadd.f32 %v916, %v940
    %942 = vmatmul.f32.gmra.mxu0 %v921
    %v943 = vpop.f32.mrf.mxu0
    %v944 = vadd.f32 %v916, %v943
    %945 = vdwg.mxu0
    %v946 = vadd.f32 %v611, %v941
    %v947 = vadd.f32 %v612, %v944
    %v948 = vsel %vm127, %v946, 0.0
    %949 = vadd.xlane.f32.xlu0 %v948
    %v950 = vpop.xlane.xlu0 %949
    %v951 = vsel %vm127, %v947, 0.0
    %952 = vadd.xlane.f32.xlu0 %v951
    %v953 = vpop.xlane.xlu0 %952
    %v954 = vmul.f32 %v950, %v454
    %v955 = vmul.f32 %v953, %v454
    %v956 = vsub.f32 %v946, %v954
    %v957 = vsub.f32 %v947, %v955
    %v958 = vmul.f32 %v956, %v956
    %v959 = vmul.f32 %v957, %v957
    %v960 = vsel %vm127, %v958, 0.0
    %961 = vadd.xlane.f32.xlu0 %v960
    %v962 = vpop.xlane.xlu0 %961
    %v963 = vsel %vm127, %v959, 0.0
    %964 = vadd.xlane.f32.xlu0 %v963
    %v965 = vpop.xlane.xlu0 %964
    %v966 = vmul.f32 %v962, %v454
    %v967 = vmul.f32 %v965, %v454
    %v968 = vadd.f32 %v966, 1e-05
    %v969 = vadd.f32 %v967, 1e-05
    %v970 = vrsqrt.pop %v968
    %v971 = vmul.f32 %v970, %v968
    %v972 = vmul.f32 %v971, %v970
    %v973 = vmul.f32 0.5, %v972
    %v974 = vsub.f32 1.5, %v973
    %v975 = vmul.f32 %v970, %v974
    %vm976 = vweird.f32 %v968
    %vm977 = vweird.f32 %v970
    %vm978 = vmor %vm976, %vm977
    %v979 = vsel %vm978, %v970, %v975
    %v980 = vrsqrt.pop %v969
    %v981 = vmul.f32 %v980, %v969
    %v982 = vmul.f32 %v981, %v980
    %v983 = vmul.f32 0.5, %v982
    %v984 = vsub.f32 1.5, %v983
    %v985 = vmul.f32 %v980, %v984
    %vm986 = vweird.f32 %v969
    %vm987 = vweird.f32 %v980
    %vm988 = vmor %vm986, %vm987
    %v989 = vsel %vm988, %v980, %v985
    %v990 = vmul.f32 %v956, %v979
    %v991 = vmul.f32 %v957, %v989
    %v992 = vperm.slane %v613, 2
    %v993 = vmul.f32 %v990, %v992
    %v994 = vmul.f32 %v991, %v992
    %v995 = vperm.slane %v613, 3
    %v996 = vadd.f32 %v993, %v995
    %v997 = vadd.f32 %v994, %v995
    %v998 = vperm.slane %v613, 4
    %v1000 = vsel %vm127, %v996, 0
    %v1003 = vsel %vm127, %v997, 0
    %1005 = vmatpush.msra.mxu0 0.0
    %1006 = vmatpush.msra.mxu0 0.0
    %1007 = vmatpush.msra.mxu0 0.0
    %1008 = vmatpush.msra.mxu0 0.0
    %1009 = vmatpush.msra.mxu0 0.0
    %1010 = vmatpush.msra.mxu0 0.0
    %1011 = vmatpush.msra.mxu0 0.0
    %1012 = vmatpush.msra.mxu0 0.0
    %1013 = vmatpush.msra.mxu0 0.0
    %1014 = vmatpush.msra.mxu0 0.0
    %1015 = vmatpush.msra.mxu0 0.0
    %1016 = vmatpush.msra.mxu0 0.0
    %1017 = vmatpush.msra.mxu0 %v625
    %1018 = vmatpush.msra.mxu0 %v624
    %1019 = vmatpush.msra.mxu0 %v623
    %1020 = vmatpush.msra.mxu0 %v622
    %1021 = vmatmul.f32.gmra.mxu0 %v1000
    %v1022 = vpop.f32.mrf.mxu0
    %v1023 = vadd.f32 %v998, %v1022
    %1024 = vmatmul.f32.gmra.mxu0 %v1003
    %v1025 = vpop.f32.mrf.mxu0
    %v1026 = vadd.f32 %v998, %v1025
    %1027 = vdwg.mxu0
    %v1028 = vmax.f32 %v1023, 0.0
    %v1029 = vmax.f32 %v1026, 0.0
    %v1030 = vperm.slane %v613, 5
    %v1032 = vsel %vm73, %v1028, 0
    %v1035 = vsel %vm73, %v1029, 0
    %1037 = vmatpush.msra.mxu0 0.0
    %1038 = vmatpush.msra.mxu0 0.0
    %1039 = vmatpush.msra.mxu0 0.0
    %1040 = vmatpush.msra.mxu0 0.0
    %1041 = vmatpush.msra.mxu0 0.0
    %1042 = vmatpush.msra.mxu0 0.0
    %1043 = vmatpush.msra.mxu0 0.0
    %1044 = vmatpush.msra.mxu0 0.0
    %1045 = vmatpush.msra.mxu0 %v633
    %1046 = vmatpush.msra.mxu0 %v632
    %1047 = vmatpush.msra.mxu0 %v631
    %1048 = vmatpush.msra.mxu0 %v630
    %1049 = vmatpush.msra.mxu0 %v629
    %1050 = vmatpush.msra.mxu0 %v628
    %1051 = vmatpush.msra.mxu0 %v627
    %1052 = vmatpush.msra.mxu0 %v626
    %1053 = vmatmul.f32.gmra.mxu0 %v1032
    %v1054 = vpop.f32.mrf.mxu0
    %v1055 = vadd.f32 %v1030, %v1054
    %1056 = vmatmul.f32.gmra.mxu0 %v1035
    %v1057 = vpop.f32.mrf.mxu0
    %v1058 = vadd.f32 %v1030, %v1057
    %1059 = vdwg.mxu0
    %v1060 = vadd.f32 %v996, %v1055
    %v1061 = vadd.f32 %v997, %v1058
    %v1062 = vsel %vm127, %v1060, 0.0
    %1063 = vadd.xlane.f32.xlu0 %v1062
    %v1064 = vpop.xlane.xlu0 %1063
    %v1065 = vsel %vm127, %v1061, 0.0
    %1066 = vadd.xlane.f32.xlu0 %v1065
    %v1067 = vpop.xlane.xlu0 %1066
    %v1068 = vmul.f32 %v1064, %v454
    %v1069 = vmul.f32 %v1067, %v454
    %v1070 = vsub.f32 %v1060, %v1068
    %v1071 = vsub.f32 %v1061, %v1069
    %v1072 = vmul.f32 %v1070, %v1070
    %v1073 = vmul.f32 %v1071, %v1071
    %v1074 = vsel %vm127, %v1072, 0.0
    %1075 = vadd.xlane.f32.xlu0 %v1074
    %v1076 = vpop.xlane.xlu0 %1075
    %v1077 = vsel %vm127, %v1073, 0.0
    %1078 = vadd.xlane.f32.xlu0 %v1077
    %v1079 = vpop.xlane.xlu0 %1078
    %v1080 = vmul.f32 %v1076, %v454
    %v1081 = vmul.f32 %v1079, %v454
    %v1082 = vadd.f32 %v1080, 1e-05
    %v1083 = vadd.f32 %v1081, 1e-05
    %v1084 = vrsqrt.pop %v1082
    %v1085 = vmul.f32 %v1084, %v1082
    %v1086 = vmul.f32 %v1085, %v1084
    %v1087 = vmul.f32 0.5, %v1086
    %v1088 = vsub.f32 1.5, %v1087
    %v1089 = vmul.f32 %v1084, %v1088
    %vm1090 = vweird.f32 %v1082
    %vm1091 = vweird.f32 %v1084
    %vm1092 = vmor %vm1090, %vm1091
    %v1093 = vsel %vm1092, %v1084, %v1089
    %v1094 = vrsqrt.pop %v1083
    %v1095 = vmul.f32 %v1094, %v1083
    %v1096 = vmul.f32 %v1095, %v1094
    %v1097 = vmul.f32 0.5, %v1096
    %v1098 = vsub.f32 1.5, %v1097
    %v1099 = vmul.f32 %v1094, %v1098
    %vm1100 = vweird.f32 %v1083
    %vm1101 = vweird.f32 %v1094
    %vm1102 = vmor %vm1100, %vm1101
    %v1103 = vsel %vm1102, %v1094, %v1099
    %v1104 = vmul.f32 %v1070, %v1093
    %v1105 = vmul.f32 %v1071, %v1103
    %v1106 = vperm.slane %v613, 6
    %v1107 = vmul.f32 %v1104, %v1106
    %v1108 = vmul.f32 %v1105, %v1106
    %v1109 = vperm.slane %v613, 7
    %v1110 = vadd.f32 %v1107, %v1109
    %v1111 = vadd.f32 %v1108, %v1109
    %v1112 = vld [vmem:[#allocation2 + $0x140] sm:$0xff]
    %v1113 = vld [vmem:[#allocation2 + $0x148] sm:$0xff]
    %v1114 = vld [vmem:[#allocation2 + $0x150] sm:$0xff]
    %v1115 = vld [vmem:[#allocation2 + $0x158] sm:$0xff]
    %v1116 = vld [vmem:[#allocation5 + $0x30] sm:$0x1]
    %v1117 = vperm.slane %v1116, 0
    %v1119 = vsel %vm127, %v1110, 0
    %v1122 = vsel %vm127, %v1111, 0
    %1124 = vmatpush.msra.mxu0 0.0
    %1125 = vmatpush.msra.mxu0 0.0
    %1126 = vmatpush.msra.mxu0 0.0
    %1127 = vmatpush.msra.mxu0 0.0
    %1128 = vmatpush.msra.mxu0 0.0
    %1129 = vmatpush.msra.mxu0 0.0
    %1130 = vmatpush.msra.mxu0 0.0
    %1131 = vmatpush.msra.mxu0 0.0
    %1132 = vmatpush.msra.mxu0 0.0
    %1133 = vmatpush.msra.mxu0 0.0
    %1134 = vmatpush.msra.mxu0 0.0
    %1135 = vmatpush.msra.mxu0 0.0
    %1136 = vmatpush.msra.mxu0 %v1115
    %1137 = vmatpush.msra.mxu0 %v1114
    %1138 = vmatpush.msra.mxu0 %v1113
    %1139 = vmatpush.msra.mxu0 %v1112
    %1140 = vmatmul.f32.gmra.mxu0 %v1119
    %v1141 = vpop.f32.mrf.mxu0
    %v1142 = vadd.f32 %v1117, %v1141
    %1143 = vmatmul.f32.gmra.mxu0 %v1122
    %v1144 = vpop.f32.mrf.mxu0
    %v1145 = vadd.f32 %v1117, %v1144
    %1146 = vdwg.mxu0
    %1147 = vmax.xlane.f32.xlu0 %v1142
    %v1148 = vpop.xlane.xlu0 %1147
    %1149 = vmax.xlane.f32.xlu0 %v1145
    %v1150 = vpop.xlane.xlu0 %1149
    %v1151 = vsub.f32 %v1142, %v1148
    %v1152 = vsub.f32 %v1145, %v1150
    %v1153 = vmul.f32 %v1151, 1.442695
    %v1154 = vpow.pop %v1153
    %v1155 = vmul.f32 %v1152, 1.442695
    %v1156 = vpow.pop %v1155
    %1157 = vadd.xlane.f32.xlu0 %v1154
    %v1158 = vpop.xlane.xlu0 %1157
    %1159 = vadd.xlane.f32.xlu0 %v1156
    %v1160 = vpop.xlane.xlu0 %1159
    %v1161 = vlog2.pop %v1158
    %v1162 = vmul.f32 %v1161, 0.6931472
    %v1163 = vlog2.pop %v1160
    %v1164 = vmul.f32 %v1163, 0.6931472
    %v1165 = vsub.f32 %v1151, %v1162
    %v1166 = vsub.f32 %v1152, %v1164
    %1167 = vst [vmem:[#allocation7] sm:$0xff] %v1165
    %1168 = vst [vmem:[#allocation7 + $0x8] sm:$0xff] %v1166
    // Predicated region
    $region22: #{transformer_forward.1} parent=1 // pred_check
      _
    $region23: #{transformer_forward.1} parent=1 // pred_check_branch
      %1170 = sbr.rel (0) target = $region25
    $region24: #{transformer_forward.1} parent=1 // pred_region
      %1172 = vsyncadd [#allocation4], 0
      %s1173 = sshll.u32 [#allocation7], 4
      %s1174 = int_to_ptr.vmem [resolvable:$true] %s1173
      %s1175 = sshll.u32 %s3, 4
      %s1176 = int_to_ptr.hbm [resolvable:$true] %s1175
      %1181 = dma.vmem_to_hbm [thread:$0]  %s1174, 256, %s1176, [#allocation4], 128, 128, 8
    $region25: #{transformer_forward.1} parent=1 // pred_fallthru
      _
    // Predicated region
    $region26: #{transformer_forward.1} parent=1 // pred_check
      _
    $region27: #{transformer_forward.1} parent=1 // pred_check_branch
      %1183 = sbr.rel (0) target = $region29
    $region28: #{transformer_forward.1} parent=1 // pred_region
      %1185 = dma.done [#allocation4], 256
    $region29: #{transformer_forward.1} parent=1 // pred_fallthru
      _
    %1186 = vsyncpa [#allocation3], 1
    %1187 = vsyncpa [#allocation6], 1
    %1188 = vsyncpa [#allocation4], 1

</llo_original>
